<compile_context>
chip_gen: v7x
topology: tpu7x:2x2x1
jax: 0.10.0
libtpu: 0.0.40
codegen_flags: <defaults>
</compile_context>

<pallas_src>
import jax
import jax.numpy as jnp
from jax.experimental import pallas as pl
from jax.experimental.pallas import tpu as pltpu


def lstm_classifier_kernel(x_ref,                        # (T, E)  f32  embedded tokens
                           wih0_ref, whh0_ref, b0_ref,   # (E,4H) bf16, (H,4H) bf16, (1,4H) f32
                           w1_ref, b1_ref,               # (2H,4H) bf16 fused [Wih1;Whh1], (1,4H) f32
                           wout_ref, bout_ref,           # (H,C) f32, (1,C) f32
                           out_ref):                     # (1,C) f32
    T = x_ref.shape[0]
    H = whh0_ref.shape[0]
    H4 = 4 * H

    # Hoisted (JAX does not CSE broadcast_in_dim inside loops): static lane mask
    # selecting the sigmoid gates [i,f,o] (lanes < 3H) vs the tanh gate g.
    lane = jax.lax.broadcasted_iota(jnp.int32, (1, H4), 1)
    sig_mask = lane < 3 * H

    def cell(gates, c):
        # Full-width EUP ops over one (1,128) vreg row, blended with one VPU select.
        act = jnp.where(sig_mask, jax.nn.sigmoid(gates), jnp.tanh(gates))
        i = act[:, 0 * H:1 * H]
        f = act[:, 1 * H:2 * H]
        o = act[:, 2 * H:3 * H]
        g = act[:, 3 * H:4 * H]
        c_new = f * c + i * g
        h_new = o * jnp.tanh(c_new)
        return h_new, c_new

    wih0 = wih0_ref[...]
    whh0 = whh0_ref[...]
    w1 = w1_ref[...]
    b1 = b1_ref[...]

    # Layer-0 input projection hoisted out of the recurrence:
    # one (T,E)@(E,4H) MXU op covering every timestep.
    xg0 = (jnp.dot(x_ref[...].astype(wih0.dtype), wih0,
                   preferred_element_type=jnp.float32)
           + b0_ref[...])                                # (T, 4H) f32

    h0 = jnp.zeros((1, H), jnp.float32)
    c0 = jnp.zeros((1, H), jnp.float32)
    h1 = jnp.zeros((1, H), jnp.float32)
    c1 = jnp.zeros((1, H), jnp.float32)

    # Wavefront-interleaved, fully unrolled recurrences (T is small and static).
    for t in range(T):
        # Layer 0, step t: only h0@Whh0 remains on the serial path.
        g0 = xg0[t:t + 1, :] + jnp.dot(h0.astype(whh0.dtype), whh0,
                                       preferred_element_type=jnp.float32)
        h0, c0 = cell(g0, c0)

        # Layer 1, step t: single fused matmul on concat([h0_t, h1_{t-1}]).
        hcat = jnp.concatenate([h0, h1], axis=1).astype(w1.dtype)     # (1, 2H)
        g1 = jnp.dot(hcat, w1, preferred_element_type=jnp.float32) + b1
        h1, c1 = cell(g1, c1)

    # TODO(synk): F.dropout in the reference defaults to training=True; inference
    # (identity) semantics are used here to keep the kernel deterministic.
    z = (jnp.dot(h1, wout_ref[...], preferred_element_type=jnp.float32)
         + bout_ref[...])
    zh = jnp.maximum(z, 0.0)                             # ReLU
    m = jnp.max(zh, axis=1, keepdims=True)               # log_softmax(dim=1)
    lse = m + jnp.log(jnp.sum(jnp.exp(zh - m), axis=1, keepdims=True))
    out_ref[...] = zh - lse


def lstm_classifier_forward(seq, params):
    (emb, wih0, whh0, bih0, bhh0,
     wih1, whh1, bih1, bhh1, wout, bout) = params
    V, E = emb.shape
    H4 = wih0.shape[0]
    H = H4 // 4
    C = wout.shape[0]
    T = seq.shape[0]

    def reorder(w):
        # PyTorch gate order [i, f, g, o] -> [i, f, o, g] (permute the 4H axis)
        # so the kernel applies sigmoid over the first 3H and tanh over the last H.
        return jnp.concatenate([w[:H], w[H:2 * H], w[3 * H:4 * H], w[2 * H:3 * H]],
                               axis=0)

    wdt = jnp.bfloat16   # recurrent-path MXU operands only; everything else f32

    # Embedding gather in the wrapper: overlaps with the pallas_call prologue
    # weight DMA instead of sitting at the head of the in-kernel serial chain.
    x = jnp.take(emb, seq.astype(jnp.int32), axis=0)      # (T, E) f32

    # Fused layer-1 weight: concat([h0_t, h1_{t-1}]) @ [[Wih1^T],[Whh1^T]].
    w1_fused = jnp.concatenate([reorder(wih1).T, reorder(whh1).T],
                               axis=0).astype(wdt)         # (2H, 4H)

    args = (
        x,
        reorder(wih0).T.astype(wdt),                       # (E, 4H)
        reorder(whh0).T.astype(wdt),                       # (H, 4H)
        reorder(bih0 + bhh0).reshape(1, H4).astype(jnp.float32),
        w1_fused,
        reorder(bih1 + bhh1).reshape(1, H4).astype(jnp.float32),
        wout.T.astype(jnp.float32),                        # (H, C) f32 (off recurrent path)
        bout.reshape(1, C).astype(jnp.float32),
    )

    def full_spec(shape):
        n = len(shape)
        return pl.BlockSpec(shape, lambda i, _n=n: (0,) * _n)

    grid_spec = pltpu.PrefetchScalarGridSpec(
        num_scalar_prefetch=0,
        grid=(1,),
        in_specs=[full_spec(a.shape) for a in args],
        out_specs=pl.BlockSpec((1, C), lambda i: (0, 0)),
    )
    return pl.pallas_call(
        lstm_classifier_kernel,
        out_shape=jax.ShapeDtypeStruct((1, C), jnp.float32),
        grid_spec=grid_spec,
        compiler_params=pltpu.CompilerParams(dimension_semantics=("arbitrary",)),
    )(*args)


def reference_forward(seq, params):
    """Pure-JAX f32 reference matching PyTorch LSTM semantics (eval dropout)."""
    (emb, wih0, whh0, bih0, bhh0,
     wih1, whh1, bih1, bhh1, wout, bout) = params
    H = whh0.shape[1]

    def cell(x, h, c, wih, whh, bih, bhh):
        g = x @ wih.T + bih + h @ whh.T + bhh
        i = jax.nn.sigmoid(g[0 * H:1 * H])
        f = jax.nn.sigmoid(g[1 * H:2 * H])
        gg = jnp.tanh(g[2 * H:3 * H])
        o = jax.nn.sigmoid(g[3 * H:4 * H])
        c = f * c + i * gg
        h = o * jnp.tanh(c)
        return h, c

    x_seq = emb[seq]
    h0 = c0 = h1 = c1 = jnp.zeros((H,), jnp.float32)
    for t in range(seq.shape[0]):
        h0, c0 = cell(x_seq[t], h0, c0, wih0, whh0, bih0, bhh0)
        h1, c1 = cell(h0, h1, c1, wih1, whh1, bih1, bhh1)
    z = h1 @ wout.T + bout
    zh = jnp.maximum(z, 0.0)
    return (zh - jax.scipy.special.logsumexp(zh))[None, :]


def init_params(key, vocab_size, embedding_dim, hidden_dim, num_classes):
    ks = jax.random.split(key, 11)
    k = 1.0 / jnp.sqrt(hidden_dim)

    def u(kk, shape):
        return jax.random.uniform(kk, shape, jnp.float32, -k, k)

    emb = jax.random.normal(ks[0], (vocab_size, embedding_dim), jnp.float32)
    emb = emb.at[0].set(0.0)                              # padding_idx=0 -> zero row
    wih0 = u(ks[1], (4 * hidden_dim, embedding_dim))
    whh0 = u(ks[2], (4 * hidden_dim, hidden_dim))
    bih0 = u(ks[3], (4 * hidden_dim,))
    bhh0 = u(ks[4], (4 * hidden_dim,))
    wih1 = u(ks[5], (4 * hidden_dim, hidden_dim))
    whh1 = u(ks[6], (4 * hidden_dim, hidden_dim))
    bih1 = u(ks[7], (4 * hidden_dim,))
    bhh1 = u(ks[8], (4 * hidden_dim,))
    wout = u(ks[9], (num_classes, hidden_dim))
    bout = u(ks[10], (num_classes,))
    return (emb, wih0, whh0, bih0, bhh0, wih1, whh1, bih1, bhh1, wout, bout)


if __name__ == "__main__":
    VOCAB, EMB, HID, NCLS, T = 50, 32, 32, 8, 8

    key = jax.random.PRNGKey(0)
    pkey, skey = jax.random.split(key)
    params = init_params(pkey, VOCAB, EMB, HID, NCLS)
    seq = jax.random.randint(skey, (T,), 0, VOCAB, dtype=jnp.int32)

    out = lstm_classifier_forward(seq, params)
    out = jax.block_until_ready(out)

    ref = reference_forward(seq, params)
    assert out.shape == (1, NCLS)
    # Tolerance relaxed vs a pure-f32 kernel because the recurrent-path matmul
    # operands are bf16 (f32 accumulation, f32 gate math, f32 output projection).
    assert jnp.allclose(out, ref, atol=2e-2, rtol=2e-2), (out, ref)
    print("KERNEL_OK")
</pallas_src>

<mosaic_0001>
module attributes {stable_mosaic.version = 11 : i64} {
  func.func @lstm_classifier_kernel(%arg0: i32, %arg1: memref<8x32xf32, #tpu.memory_space<vmem>>, %arg2: memref<32x128xbf16, #tpu.memory_space<vmem>>, %arg3: memref<32x128xbf16, #tpu.memory_space<vmem>>, %arg4: memref<1x128xf32, #tpu.memory_space<vmem>>, %arg5: memref<64x128xbf16, #tpu.memory_space<vmem>>, %arg6: memref<1x128xf32, #tpu.memory_space<vmem>>, %arg7: memref<32x8xf32, #tpu.memory_space<vmem>>, %arg8: memref<1x8xf32, #tpu.memory_space<vmem>>, %arg9: memref<1x8xf32, #tpu.memory_space<vmem>>) attributes {dimension_semantics = [#tpu.dimension_semantics<arbitrary>], iteration_bounds = array<i64: 1>, scalar_prefetch = 0 : i64, scratch_operands = 0 : i64, tpu.core_type = #tpu.core_type<tc>, window_params = [{pipeline_mode = #tpu.pipeline_mode<synchronous>, transform_indices = @transform_0, window_bounds = array<i64: 8, 32>}, {pipeline_mode = #tpu.pipeline_mode<synchronous>, transform_indices = @transform_1, window_bounds = array<i64: 32, 128>}, {pipeline_mode = #tpu.pipeline_mode<synchronous>, transform_indices = @transform_2, window_bounds = array<i64: 32, 128>}, {pipeline_mode = #tpu.pipeline_mode<synchronous>, transform_indices = @transform_3, window_bounds = array<i64: 1, 128>}, {pipeline_mode = #tpu.pipeline_mode<synchronous>, transform_indices = @transform_4, window_bounds = array<i64: 64, 128>}, {pipeline_mode = #tpu.pipeline_mode<synchronous>, transform_indices = @transform_5, window_bounds = array<i64: 1, 128>}, {pipeline_mode = #tpu.pipeline_mode<synchronous>, transform_indices = @transform_6, window_bounds = array<i64: 32, 8>}, {pipeline_mode = #tpu.pipeline_mode<synchronous>, transform_indices = @transform_7, window_bounds = array<i64: 1, 8>}, {pipeline_mode = #tpu.pipeline_mode<synchronous>, transform_indices = @transform_8, window_bounds = array<i64: 1, 8>}]} {
    %0 = tpu.iota {dimensions = array<i32: 1>} : vector<1x128xi32>
    %c96_i32 = arith.constant 96 : i32
    %1 = vector.broadcast %c96_i32 : i32 to vector<1x128xi32>
    %2 = arith.cmpi slt, %0, %1 : vector<1x128xi32>
    %c0 = arith.constant 0 : index
    %c0_0 = arith.constant 0 : index
    %3 = vector.load %arg2[%c0, %c0_0] : memref<32x128xbf16, #tpu.memory_space<vmem>>, vector<32x128xbf16>
    %c0_1 = arith.constant 0 : index
    %c0_2 = arith.constant 0 : index
    %4 = vector.load %arg3[%c0_1, %c0_2] : memref<32x128xbf16, #tpu.memory_space<vmem>>, vector<32x128xbf16>
    %c0_3 = arith.constant 0 : index
    %c0_4 = arith.constant 0 : index
    %5 = vector.load %arg5[%c0_3, %c0_4] : memref<64x128xbf16, #tpu.memory_space<vmem>>, vector<64x128xbf16>
    %c0_5 = arith.constant 0 : index
    %c0_6 = arith.constant 0 : index
    %6 = vector.load %arg6[%c0_5, %c0_6] : memref<1x128xf32, #tpu.memory_space<vmem>>, vector<1x128xf32>
    %c0_7 = arith.constant 0 : index
    %c0_8 = arith.constant 0 : index
    %7 = vector.load %arg1[%c0_7, %c0_8] : memref<8x32xf32, #tpu.memory_space<vmem>>, vector<8x32xf32>
    %8 = arith.truncf %7 : vector<8x32xf32> to vector<8x32xbf16>
    %cst = arith.constant dense<0.000000e+00> : vector<8x128xf32>
    %9 = tpu.matmul %8, %3, %cst {dimension_numbers = #tpu.dot_dimension_numbers<[1], [0], [0], [1], [0, 0, 1, 1], [], []>} : vector<8x32xbf16>, vector<32x128xbf16>, vector<8x128xf32> -> vector<8x128xf32>
    %c0_9 = arith.constant 0 : index
    %c0_10 = arith.constant 0 : index
    %10 = vector.load %arg4[%c0_9, %c0_10] : memref<1x128xf32, #tpu.memory_space<vmem>>, vector<1x128xf32>
    %11 = vector.broadcast %10 : vector<1x128xf32> to vector<8x128xf32>
    %12 = arith.addf %9, %11 : vector<8x128xf32>
    %cst_11 = arith.constant 0.000000e+00 : f32
    %13 = vector.broadcast %cst_11 : f32 to vector<1x32xf32>
    %cst_12 = arith.constant 0.000000e+00 : f32
    %14 = vector.broadcast %cst_12 : f32 to vector<1x32xf32>
    %cst_13 = arith.constant 0.000000e+00 : f32
    %15 = vector.broadcast %cst_13 : f32 to vector<1x32xf32>
    %cst_14 = arith.constant 0.000000e+00 : f32
    %16 = vector.broadcast %cst_14 : f32 to vector<1x32xf32>
    %17 = vector.extract_strided_slice %12 {offsets = [0, 0], sizes = [1, 128], strides = [1, 1]} : vector<8x128xf32> to vector<1x128xf32>
    %18 = arith.truncf %13 : vector<1x32xf32> to vector<1x32xbf16>
    %cst_15 = arith.constant dense<0.000000e+00> : vector<1x128xf32>
    %19 = tpu.matmul %18, %4, %cst_15 {dimension_numbers = #tpu.dot_dimension_numbers<[1], [0], [0], [1], [0, 0, 1, 1], [], []>} : vector<1x32xbf16>, vector<32x128xbf16>, vector<1x128xf32> -> vector<1x128xf32>
    %20 = arith.addf %17, %19 : vector<1x128xf32>
    %21 = arith.negf %20 : vector<1x128xf32>
    %22 = math.exp %21 : vector<1x128xf32>
    %cst_16 = arith.constant 1.000000e+00 : f32
    %23 = vector.broadcast %cst_16 : f32 to vector<1x128xf32>
    %24 = arith.addf %23, %22 : vector<1x128xf32>
    %25 = arith.divf %23, %24 : vector<1x128xf32>
    %26 = math.tanh %20 : vector<1x128xf32>
    %27 = arith.select %2, %25, %26 : vector<1x128xi1>, vector<1x128xf32>
    %28 = vector.extract_strided_slice %27 {offsets = [0, 0], sizes = [1, 32], strides = [1, 1]} : vector<1x128xf32> to vector<1x32xf32>
    %29 = vector.extract_strided_slice %27 {offsets = [0, 32], sizes = [1, 32], strides = [1, 1]} : vector<1x128xf32> to vector<1x32xf32>
    %30 = vector.extract_strided_slice %27 {offsets = [0, 64], sizes = [1, 32], strides = [1, 1]} : vector<1x128xf32> to vector<1x32xf32>
    %31 = vector.extract_strided_slice %27 {offsets = [0, 96], sizes = [1, 32], strides = [1, 1]} : vector<1x128xf32> to vector<1x32xf32>
    %32 = arith.mulf %29, %14 : vector<1x32xf32>
    %33 = arith.mulf %28, %31 : vector<1x32xf32>
    %34 = arith.addf %32, %33 : vector<1x32xf32>
    %35 = math.tanh %34 : vector<1x32xf32>
    %36 = arith.mulf %30, %35 : vector<1x32xf32>
    %37 = tpu.concatenate %36, %15 in 1 : vector<1x32xf32>, vector<1x32xf32> -> vector<1x64xf32>
    %38 = arith.truncf %37 : vector<1x64xf32> to vector<1x64xbf16>
    %cst_17 = arith.constant dense<0.000000e+00> : vector<1x128xf32>
    %39 = tpu.matmul %38, %5, %cst_17 {dimension_numbers = #tpu.dot_dimension_numbers<[1], [0], [0], [1], [0, 0, 1, 1], [], []>} : vector<1x64xbf16>, vector<64x128xbf16>, vector<1x128xf32> -> vector<1x128xf32>
    %40 = arith.addf %39, %6 : vector<1x128xf32>
    %41 = arith.negf %40 : vector<1x128xf32>
    %42 = math.exp %41 : vector<1x128xf32>
    %cst_18 = arith.constant 1.000000e+00 : f32
    %43 = vector.broadcast %cst_18 : f32 to vector<1x128xf32>
    %44 = arith.addf %43, %42 : vector<1x128xf32>
    %45 = arith.divf %43, %44 : vector<1x128xf32>
    %46 = math.tanh %40 : vector<1x128xf32>
    %47 = arith.select %2, %45, %46 : vector<1x128xi1>, vector<1x128xf32>
    %48 = vector.extract_strided_slice %47 {offsets = [0, 0], sizes = [1, 32], strides = [1, 1]} : vector<1x128xf32> to vector<1x32xf32>
    %49 = vector.extract_strided_slice %47 {offsets = [0, 32], sizes = [1, 32], strides = [1, 1]} : vector<1x128xf32> to vector<1x32xf32>
    %50 = vector.extract_strided_slice %47 {offsets = [0, 64], sizes = [1, 32], strides = [1, 1]} : vector<1x128xf32> to vector<1x32xf32>
    %51 = vector.extract_strided_slice %47 {offsets = [0, 96], sizes = [1, 32], strides = [1, 1]} : vector<1x128xf32> to vector<1x32xf32>
    %52 = arith.mulf %49, %16 : vector<1x32xf32>
    %53 = arith.mulf %48, %51 : vector<1x32xf32>
    %54 = arith.addf %52, %53 : vector<1x32xf32>
    %55 = math.tanh %54 : vector<1x32xf32>
    %56 = arith.mulf %50, %55 : vector<1x32xf32>
    %57 = vector.extract_strided_slice %12 {offsets = [1, 0], sizes = [1, 128], strides = [1, 1]} : vector<8x128xf32> to vector<1x128xf32>
    %58 = arith.truncf %36 : vector<1x32xf32> to vector<1x32xbf16>
    %cst_19 = arith.constant dense<0.000000e+00> : vector<1x128xf32>
    %59 = tpu.matmul %58, %4, %cst_19 {dimension_numbers = #tpu.dot_dimension_numbers<[1], [0], [0], [1], [0, 0, 1, 1], [], []>} : vector<1x32xbf16>, vector<32x128xbf16>, vector<1x128xf32> -> vector<1x128xf32>
    %60 = arith.addf %57, %59 : vector<1x128xf32>
    %61 = arith.negf %60 : vector<1x128xf32>
    %62 = math.exp %61 : vector<1x128xf32>
    %cst_20 = arith.constant 1.000000e+00 : f32
    %63 = vector.broadcast %cst_20 : f32 to vector<1x128xf32>
    %64 = arith.addf %63, %62 : vector<1x128xf32>
    %65 = arith.divf %63, %64 : vector<1x128xf32>
    %66 = math.tanh %60 : vector<1x128xf32>
    %67 = arith.select %2, %65, %66 : vector<1x128xi1>, vector<1x128xf32>
    %68 = vector.extract_strided_slice %67 {offsets = [0, 0], sizes = [1, 32], strides = [1, 1]} : vector<1x128xf32> to vector<1x32xf32>
    %69 = vector.extract_strided_slice %67 {offsets = [0, 32], sizes = [1, 32], strides = [1, 1]} : vector<1x128xf32> to vector<1x32xf32>
    %70 = vector.extract_strided_slice %67 {offsets = [0, 64], sizes = [1, 32], strides = [1, 1]} : vector<1x128xf32> to vector<1x32xf32>
    %71 = vector.extract_strided_slice %67 {offsets = [0, 96], sizes = [1, 32], strides = [1, 1]} : vector<1x128xf32> to vector<1x32xf32>
    %72 = arith.mulf %69, %34 : vector<1x32xf32>
    %73 = arith.mulf %68, %71 : vector<1x32xf32>
    %74 = arith.addf %72, %73 : vector<1x32xf32>
    %75 = math.tanh %74 : vector<1x32xf32>
    %76 = arith.mulf %70, %75 : vector<1x32xf32>
    %77 = tpu.concatenate %76, %56 in 1 : vector<1x32xf32>, vector<1x32xf32> -> vector<1x64xf32>
    %78 = arith.truncf %77 : vector<1x64xf32> to vector<1x64xbf16>
    %cst_21 = arith.constant dense<0.000000e+00> : vector<1x128xf32>
    %79 = tpu.matmul %78, %5, %cst_21 {dimension_numbers = #tpu.dot_dimension_numbers<[1], [0], [0], [1], [0, 0, 1, 1], [], []>} : vector<1x64xbf16>, vector<64x128xbf16>, vector<1x128xf32> -> vector<1x128xf32>
    %80 = arith.addf %79, %6 : vector<1x128xf32>
    %81 = arith.negf %80 : vector<1x128xf32>
    %82 = math.exp %81 : vector<1x128xf32>
    %cst_22 = arith.constant 1.000000e+00 : f32
    %83 = vector.broadcast %cst_22 : f32 to vector<1x128xf32>
    %84 = arith.addf %83, %82 : vector<1x128xf32>
    %85 = arith.divf %83, %84 : vector<1x128xf32>
    %86 = math.tanh %80 : vector<1x128xf32>
    %87 = arith.select %2, %85, %86 : vector<1x128xi1>, vector<1x128xf32>
    %88 = vector.extract_strided_slice %87 {offsets = [0, 0], sizes = [1, 32], strides = [1, 1]} : vector<1x128xf32> to vector<1x32xf32>
    %89 = vector.extract_strided_slice %87 {offsets = [0, 32], sizes = [1, 32], strides = [1, 1]} : vector<1x128xf32> to vector<1x32xf32>
    %90 = vector.extract_strided_slice %87 {offsets = [0, 64], sizes = [1, 32], strides = [1, 1]} : vector<1x128xf32> to vector<1x32xf32>
    %91 = vector.extract_strided_slice %87 {offsets = [0, 96], sizes = [1, 32], strides = [1, 1]} : vector<1x128xf32> to vector<1x32xf32>
    %92 = arith.mulf %89, %54 : vector<1x32xf32>
    %93 = arith.mulf %88, %91 : vector<1x32xf32>
    %94 = arith.addf %92, %93 : vector<1x32xf32>
    %95 = math.tanh %94 : vector<1x32xf32>
    %96 = arith.mulf %90, %95 : vector<1x32xf32>
    %97 = vector.extract_strided_slice %12 {offsets = [2, 0], sizes = [1, 128], strides = [1, 1]} : vector<8x128xf32> to vector<1x128xf32>
    %98 = arith.truncf %76 : vector<1x32xf32> to vector<1x32xbf16>
    %cst_23 = arith.constant dense<0.000000e+00> : vector<1x128xf32>
    %99 = tpu.matmul %98, %4, %cst_23 {dimension_numbers = #tpu.dot_dimension_numbers<[1], [0], [0], [1], [0, 0, 1, 1], [], []>} : vector<1x32xbf16>, vector<32x128xbf16>, vector<1x128xf32> -> vector<1x128xf32>
    %100 = arith.addf %97, %99 : vector<1x128xf32>
    %101 = arith.negf %100 : vector<1x128xf32>
    %102 = math.exp %101 : vector<1x128xf32>
    %cst_24 = arith.constant 1.000000e+00 : f32
    %103 = vector.broadcast %cst_24 : f32 to vector<1x128xf32>
    %104 = arith.addf %103, %102 : vector<1x128xf32>
    %105 = arith.divf %103, %104 : vector<1x128xf32>
    %106 = math.tanh %100 : vector<1x128xf32>
    %107 = arith.select %2, %105, %106 : vector<1x128xi1>, vector<1x128xf32>
    %108 = vector.extract_strided_slice %107 {offsets = [0, 0], sizes = [1, 32], strides = [1, 1]} : vector<1x128xf32> to vector<1x32xf32>
    %109 = vector.extract_strided_slice %107 {offsets = [0, 32], sizes = [1, 32], strides = [1, 1]} : vector<1x128xf32> to vector<1x32xf32>
    %110 = vector.extract_strided_slice %107 {offsets = [0, 64], sizes = [1, 32], strides = [1, 1]} : vector<1x128xf32> to vector<1x32xf32>
    %111 = vector.extract_strided_slice %107 {offsets = [0, 96], sizes = [1, 32], strides = [1, 1]} : vector<1x128xf32> to vector<1x32xf32>
    %112 = arith.mulf %109, %74 : vector<1x32xf32>
    %113 = arith.mulf %108, %111 : vector<1x32xf32>
    %114 = arith.addf %112, %113 : vector<1x32xf32>
    %115 = math.tanh %114 : vector<1x32xf32>
    %116 = arith.mulf %110, %115 : vector<1x32xf32>
    %117 = tpu.concatenate %116, %96 in 1 : vector<1x32xf32>, vector<1x32xf32> -> vector<1x64xf32>
    %118 = arith.truncf %117 : vector<1x64xf32> to vector<1x64xbf16>
    %cst_25 = arith.constant dense<0.000000e+00> : vector<1x128xf32>
    %119 = tpu.matmul %118, %5, %cst_25 {dimension_numbers = #tpu.dot_dimension_numbers<[1], [0], [0], [1], [0, 0, 1, 1], [], []>} : vector<1x64xbf16>, vector<64x128xbf16>, vector<1x128xf32> -> vector<1x128xf32>
    %120 = arith.addf %119, %6 : vector<1x128xf32>
    %121 = arith.negf %120 : vector<1x128xf32>
    %122 = math.exp %121 : vector<1x128xf32>
    %cst_26 = arith.constant 1.000000e+00 : f32
    %123 = vector.broadcast %cst_26 : f32 to vector<1x128xf32>
    %124 = arith.addf %123, %122 : vector<1x128xf32>
    %125 = arith.divf %123, %124 : vector<1x128xf32>
    %126 = math.tanh %120 : vector<1x128xf32>
    %127 = arith.select %2, %125, %126 : vector<1x128xi1>, vector<1x128xf32>
    %128 = vector.extract_strided_slice %127 {offsets = [0, 0], sizes = [1, 32], strides = [1, 1]} : vector<1x128xf32> to vector<1x32xf32>
    %129 = vector.extract_strided_slice %127 {offsets = [0, 32], sizes = [1, 32], strides = [1, 1]} : vector<1x128xf32> to vector<1x32xf32>
    %130 = vector.extract_strided_slice %127 {offsets = [0, 64], sizes = [1, 32], strides = [1, 1]} : vector<1x128xf32> to vector<1x32xf32>
    %131 = vector.extract_strided_slice %127 {offsets = [0, 96], sizes = [1, 32], strides = [1, 1]} : vector<1x128xf32> to vector<1x32xf32>
    %132 = arith.mulf %129, %94 : vector<1x32xf32>
    %133 = arith.mulf %128, %131 : vector<1x32xf32>
    %134 = arith.addf %132, %133 : vector<1x32xf32>
    %135 = math.tanh %134 : vector<1x32xf32>
    %136 = arith.mulf %130, %135 : vector<1x32xf32>
    %137 = vector.extract_strided_slice %12 {offsets = [3, 0], sizes = [1, 128], strides = [1, 1]} : vector<8x128xf32> to vector<1x128xf32>
    %138 = arith.truncf %116 : vector<1x32xf32> to vector<1x32xbf16>
    %cst_27 = arith.constant dense<0.000000e+00> : vector<1x128xf32>
    %139 = tpu.matmul %138, %4, %cst_27 {dimension_numbers = #tpu.dot_dimension_numbers<[1], [0], [0], [1], [0, 0, 1, 1], [], []>} : vector<1x32xbf16>, vector<32x128xbf16>, vector<1x128xf32> -> vector<1x128xf32>
    %140 = arith.addf %137, %139 : vector<1x128xf32>
    %141 = arith.negf %140 : vector<1x128xf32>
    %142 = math.exp %141 : vector<1x128xf32>
    %cst_28 = arith.constant 1.000000e+00 : f32
    %143 = vector.broadcast %cst_28 : f32 to vector<1x128xf32>
    %144 = arith.addf %143, %142 : vector<1x128xf32>
    %145 = arith.divf %143, %144 : vector<1x128xf32>
    %146 = math.tanh %140 : vector<1x128xf32>
    %147 = arith.select %2, %145, %146 : vector<1x128xi1>, vector<1x128xf32>
    %148 = vector.extract_strided_slice %147 {offsets = [0, 0], sizes = [1, 32], strides = [1, 1]} : vector<1x128xf32> to vector<1x32xf32>
    %149 = vector.extract_strided_slice %147 {offsets = [0, 32], sizes = [1, 32], strides = [1, 1]} : vector<1x128xf32> to vector<1x32xf32>
    %150 = vector.extract_strided_slice %147 {offsets = [0, 64], sizes = [1, 32], strides = [1, 1]} : vector<1x128xf32> to vector<1x32xf32>
    %151 = vector.extract_strided_slice %147 {offsets = [0, 96], sizes = [1, 32], strides = [1, 1]} : vector<1x128xf32> to vector<1x32xf32>
    %152 = arith.mulf %149, %114 : vector<1x32xf32>
    %153 = arith.mulf %148, %151 : vector<1x32xf32>
    %154 = arith.addf %152, %153 : vector<1x32xf32>
    %155 = math.tanh %154 : vector<1x32xf32>
    %156 = arith.mulf %150, %155 : vector<1x32xf32>
    %157 = tpu.concatenate %156, %136 in 1 : vector<1x32xf32>, vector<1x32xf32> -> vector<1x64xf32>
    %158 = arith.truncf %157 : vector<1x64xf32> to vector<1x64xbf16>
    %cst_29 = arith.constant dense<0.000000e+00> : vector<1x128xf32>
    %159 = tpu.matmul %158, %5, %cst_29 {dimension_numbers = #tpu.dot_dimension_numbers<[1], [0], [0], [1], [0, 0, 1, 1], [], []>} : vector<1x64xbf16>, vector<64x128xbf16>, vector<1x128xf32> -> vector<1x128xf32>
    %160 = arith.addf %159, %6 : vector<1x128xf32>
    %161 = arith.negf %160 : vector<1x128xf32>
    %162 = math.exp %161 : vector<1x128xf32>
    %cst_30 = arith.constant 1.000000e+00 : f32
    %163 = vector.broadcast %cst_30 : f32 to vector<1x128xf32>
    %164 = arith.addf %163, %162 : vector<1x128xf32>
    %165 = arith.divf %163, %164 : vector<1x128xf32>
    %166 = math.tanh %160 : vector<1x128xf32>
    %167 = arith.select %2, %165, %166 : vector<1x128xi1>, vector<1x128xf32>
    %168 = vector.extract_strided_slice %167 {offsets = [0, 0], sizes = [1, 32], strides = [1, 1]} : vector<1x128xf32> to vector<1x32xf32>
    %169 = vector.extract_strided_slice %167 {offsets = [0, 32], sizes = [1, 32], strides = [1, 1]} : vector<1x128xf32> to vector<1x32xf32>
    %170 = vector.extract_strided_slice %167 {offsets = [0, 64], sizes = [1, 32], strides = [1, 1]} : vector<1x128xf32> to vector<1x32xf32>
    %171 = vector.extract_strided_slice %167 {offsets = [0, 96], sizes = [1, 32], strides = [1, 1]} : vector<1x128xf32> to vector<1x32xf32>
    %172 = arith.mulf %169, %134 : vector<1x32xf32>
    %173 = arith.mulf %168, %171 : vector<1x32xf32>
    %174 = arith.addf %172, %173 : vector<1x32xf32>
    %175 = math.tanh %174 : vector<1x32xf32>
    %176 = arith.mulf %170, %175 : vector<1x32xf32>
    %177 = vector.extract_strided_slice %12 {offsets = [4, 0], sizes = [1, 128], strides = [1, 1]} : vector<8x128xf32> to vector<1x128xf32>
    %178 = arith.truncf %156 : vector<1x32xf32> to vector<1x32xbf16>
    %cst_31 = arith.constant dense<0.000000e+00> : vector<1x128xf32>
    %179 = tpu.matmul %178, %4, %cst_31 {dimension_numbers = #tpu.dot_dimension_numbers<[1], [0], [0], [1], [0, 0, 1, 1], [], []>} : vector<1x32xbf16>, vector<32x128xbf16>, vector<1x128xf32> -> vector<1x128xf32>
    %180 = arith.addf %177, %179 : vector<1x128xf32>
    %181 = arith.negf %180 : vector<1x128xf32>
    %182 = math.exp %181 : vector<1x128xf32>
    %cst_32 = arith.constant 1.000000e+00 : f32
    %183 = vector.broadcast %cst_32 : f32 to vector<1x128xf32>
    %184 = arith.addf %183, %182 : vector<1x128xf32>
    %185 = arith.divf %183, %184 : vector<1x128xf32>
    %186 = math.tanh %180 : vector<1x128xf32>
    %187 = arith.select %2, %185, %186 : vector<1x128xi1>, vector<1x128xf32>
    %188 = vector.extract_strided_slice %187 {offsets = [0, 0], sizes = [1, 32], strides = [1, 1]} : vector<1x128xf32> to vector<1x32xf32>
    %189 = vector.extract_strided_slice %187 {offsets = [0, 32], sizes = [1, 32], strides = [1, 1]} : vector<1x128xf32> to vector<1x32xf32>
    %190 = vector.extract_strided_slice %187 {offsets = [0, 64], sizes = [1, 32], strides = [1, 1]} : vector<1x128xf32> to vector<1x32xf32>
    %191 = vector.extract_strided_slice %187 {offsets = [0, 96], sizes = [1, 32], strides = [1, 1]} : vector<1x128xf32> to vector<1x32xf32>
    %192 = arith.mulf %189, %154 : vector<1x32xf32>
    %193 = arith.mulf %188, %191 : vector<1x32xf32>
    %194 = arith.addf %192, %193 : vector<1x32xf32>
    %195 = math.tanh %194 : vector<1x32xf32>
    %196 = arith.mulf %190, %195 : vector<1x32xf32>
    %197 = tpu.concatenate %196, %176 in 1 : vector<1x32xf32>, vector<1x32xf32> -> vector<1x64xf32>
    %198 = arith.truncf %197 : vector<1x64xf32> to vector<1x64xbf16>
    %cst_33 = arith.constant dense<0.000000e+00> : vector<1x128xf32>
    %199 = tpu.matmul %198, %5, %cst_33 {dimension_numbers = #tpu.dot_dimension_numbers<[1], [0], [0], [1], [0, 0, 1, 1], [], []>} : vector<1x64xbf16>, vector<64x128xbf16>, vector<1x128xf32> -> vector<1x128xf32>
    %200 = arith.addf %199, %6 : vector<1x128xf32>
    %201 = arith.negf %200 : vector<1x128xf32>
    %202 = math.exp %201 : vector<1x128xf32>
    %cst_34 = arith.constant 1.000000e+00 : f32
    %203 = vector.broadcast %cst_34 : f32 to vector<1x128xf32>
    %204 = arith.addf %203, %202 : vector<1x128xf32>
    %205 = arith.divf %203, %204 : vector<1x128xf32>
    %206 = math.tanh %200 : vector<1x128xf32>
    %207 = arith.select %2, %205, %206 : vector<1x128xi1>, vector<1x128xf32>
    %208 = vector.extract_strided_slice %207 {offsets = [0, 0], sizes = [1, 32], strides = [1, 1]} : vector<1x128xf32> to vector<1x32xf32>
    %209 = vector.extract_strided_slice %207 {offsets = [0, 32], sizes = [1, 32], strides = [1, 1]} : vector<1x128xf32> to vector<1x32xf32>
    %210 = vector.extract_strided_slice %207 {offsets = [0, 64], sizes = [1, 32], strides = [1, 1]} : vector<1x128xf32> to vector<1x32xf32>
    %211 = vector.extract_strided_slice %207 {offsets = [0, 96], sizes = [1, 32], strides = [1, 1]} : vector<1x128xf32> to vector<1x32xf32>
    %212 = arith.mulf %209, %174 : vector<1x32xf32>
    %213 = arith.mulf %208, %211 : vector<1x32xf32>
    %214 = arith.addf %212, %213 : vector<1x32xf32>
    %215 = math.tanh %214 : vector<1x32xf32>
    %216 = arith.mulf %210, %215 : vector<1x32xf32>
    %217 = vector.extract_strided_slice %12 {offsets = [5, 0], sizes = [1, 128], strides = [1, 1]} : vector<8x128xf32> to vector<1x128xf32>
    %218 = arith.truncf %196 : vector<1x32xf32> to vector<1x32xbf16>
    %cst_35 = arith.constant dense<0.000000e+00> : vector<1x128xf32>
    %219 = tpu.matmul %218, %4, %cst_35 {dimension_numbers = #tpu.dot_dimension_numbers<[1], [0], [0], [1], [0, 0, 1, 1], [], []>} : vector<1x32xbf16>, vector<32x128xbf16>, vector<1x128xf32> -> vector<1x128xf32>
    %220 = arith.addf %217, %219 : vector<1x128xf32>
    %221 = arith.negf %220 : vector<1x128xf32>
    %222 = math.exp %221 : vector<1x128xf32>
    %cst_36 = arith.constant 1.000000e+00 : f32
    %223 = vector.broadcast %cst_36 : f32 to vector<1x128xf32>
    %224 = arith.addf %223, %222 : vector<1x128xf32>
    %225 = arith.divf %223, %224 : vector<1x128xf32>
    %226 = math.tanh %220 : vector<1x128xf32>
    %227 = arith.select %2, %225, %226 : vector<1x128xi1>, vector<1x128xf32>
    %228 = vector.extract_strided_slice %227 {offsets = [0, 0], sizes = [1, 32], strides = [1, 1]} : vector<1x128xf32> to vector<1x32xf32>
    %229 = vector.extract_strided_slice %227 {offsets = [0, 32], sizes = [1, 32], strides = [1, 1]} : vector<1x128xf32> to vector<1x32xf32>
    %230 = vector.extract_strided_slice %227 {offsets = [0, 64], sizes = [1, 32], strides = [1, 1]} : vector<1x128xf32> to vector<1x32xf32>
    %231 = vector.extract_strided_slice %227 {offsets = [0, 96], sizes = [1, 32], strides = [1, 1]} : vector<1x128xf32> to vector<1x32xf32>
    %232 = arith.mulf %229, %194 : vector<1x32xf32>
    %233 = arith.mulf %228, %231 : vector<1x32xf32>
    %234 = arith.addf %232, %233 : vector<1x32xf32>
    %235 = math.tanh %234 : vector<1x32xf32>
    %236 = arith.mulf %230, %235 : vector<1x32xf32>
    %237 = tpu.concatenate %236, %216 in 1 : vector<1x32xf32>, vector<1x32xf32> -> vector<1x64xf32>
    %238 = arith.truncf %237 : vector<1x64xf32> to vector<1x64xbf16>
    %cst_37 = arith.constant dense<0.000000e+00> : vector<1x128xf32>
    %239 = tpu.matmul %238, %5, %cst_37 {dimension_numbers = #tpu.dot_dimension_numbers<[1], [0], [0], [1], [0, 0, 1, 1], [], []>} : vector<1x64xbf16>, vector<64x128xbf16>, vector<1x128xf32> -> vector<1x128xf32>
    %240 = arith.addf %239, %6 : vector<1x128xf32>
    %241 = arith.negf %240 : vector<1x128xf32>
    %242 = math.exp %241 : vector<1x128xf32>
    %cst_38 = arith.constant 1.000000e+00 : f32
    %243 = vector.broadcast %cst_38 : f32 to vector<1x128xf32>
    %244 = arith.addf %243, %242 : vector<1x128xf32>
    %245 = arith.divf %243, %244 : vector<1x128xf32>
    %246 = math.tanh %240 : vector<1x128xf32>
    %247 = arith.select %2, %245, %246 : vector<1x128xi1>, vector<1x128xf32>
    %248 = vector.extract_strided_slice %247 {offsets = [0, 0], sizes = [1, 32], strides = [1, 1]} : vector<1x128xf32> to vector<1x32xf32>
    %249 = vector.extract_strided_slice %247 {offsets = [0, 32], sizes = [1, 32], strides = [1, 1]} : vector<1x128xf32> to vector<1x32xf32>
    %250 = vector.extract_strided_slice %247 {offsets = [0, 64], sizes = [1, 32], strides = [1, 1]} : vector<1x128xf32> to vector<1x32xf32>
    %251 = vector.extract_strided_slice %247 {offsets = [0, 96], sizes = [1, 32], strides = [1, 1]} : vector<1x128xf32> to vector<1x32xf32>
    %252 = arith.mulf %249, %214 : vector<1x32xf32>
    %253 = arith.mulf %248, %251 : vector<1x32xf32>
    %254 = arith.addf %252, %253 : vector<1x32xf32>
    %255 = math.tanh %254 : vector<1x32xf32>
    %256 = arith.mulf %250, %255 : vector<1x32xf32>
    %257 = vector.extract_strided_slice %12 {offsets = [6, 0], sizes = [1, 128], strides = [1, 1]} : vector<8x128xf32> to vector<1x128xf32>
    %258 = arith.truncf %236 : vector<1x32xf32> to vector<1x32xbf16>
    %cst_39 = arith.constant dense<0.000000e+00> : vector<1x128xf32>
    %259 = tpu.matmul %258, %4, %cst_39 {dimension_numbers = #tpu.dot_dimension_numbers<[1], [0], [0], [1], [0, 0, 1, 1], [], []>} : vector<1x32xbf16>, vector<32x128xbf16>, vector<1x128xf32> -> vector<1x128xf32>
    %260 = arith.addf %257, %259 : vector<1x128xf32>
    %261 = arith.negf %260 : vector<1x128xf32>
    %262 = math.exp %261 : vector<1x128xf32>
    %cst_40 = arith.constant 1.000000e+00 : f32
    %263 = vector.broadcast %cst_40 : f32 to vector<1x128xf32>
    %264 = arith.addf %263, %262 : vector<1x128xf32>
    %265 = arith.divf %263, %264 : vector<1x128xf32>
    %266 = math.tanh %260 : vector<1x128xf32>
    %267 = arith.select %2, %265, %266 : vector<1x128xi1>, vector<1x128xf32>
    %268 = vector.extract_strided_slice %267 {offsets = [0, 0], sizes = [1, 32], strides = [1, 1]} : vector<1x128xf32> to vector<1x32xf32>
    %269 = vector.extract_strided_slice %267 {offsets = [0, 32], sizes = [1, 32], strides = [1, 1]} : vector<1x128xf32> to vector<1x32xf32>
    %270 = vector.extract_strided_slice %267 {offsets = [0, 64], sizes = [1, 32], strides = [1, 1]} : vector<1x128xf32> to vector<1x32xf32>
    %271 = vector.extract_strided_slice %267 {offsets = [0, 96], sizes = [1, 32], strides = [1, 1]} : vector<1x128xf32> to vector<1x32xf32>
    %272 = arith.mulf %269, %234 : vector<1x32xf32>
    %273 = arith.mulf %268, %271 : vector<1x32xf32>
    %274 = arith.addf %272, %273 : vector<1x32xf32>
    %275 = math.tanh %274 : vector<1x32xf32>
    %276 = arith.mulf %270, %275 : vector<1x32xf32>
    %277 = tpu.concatenate %276, %256 in 1 : vector<1x32xf32>, vector<1x32xf32> -> vector<1x64xf32>
    %278 = arith.truncf %277 : vector<1x64xf32> to vector<1x64xbf16>
    %cst_41 = arith.constant dense<0.000000e+00> : vector<1x128xf32>
    %279 = tpu.matmul %278, %5, %cst_41 {dimension_numbers = #tpu.dot_dimension_numbers<[1], [0], [0], [1], [0, 0, 1, 1], [], []>} : vector<1x64xbf16>, vector<64x128xbf16>, vector<1x128xf32> -> vector<1x128xf32>
    %280 = arith.addf %279, %6 : vector<1x128xf32>
    %281 = arith.negf %280 : vector<1x128xf32>
    %282 = math.exp %281 : vector<1x128xf32>
    %cst_42 = arith.constant 1.000000e+00 : f32
    %283 = vector.broadcast %cst_42 : f32 to vector<1x128xf32>
    %284 = arith.addf %283, %282 : vector<1x128xf32>
    %285 = arith.divf %283, %284 : vector<1x128xf32>
    %286 = math.tanh %280 : vector<1x128xf32>
    %287 = arith.select %2, %285, %286 : vector<1x128xi1>, vector<1x128xf32>
    %288 = vector.extract_strided_slice %287 {offsets = [0, 0], sizes = [1, 32], strides = [1, 1]} : vector<1x128xf32> to vector<1x32xf32>
    %289 = vector.extract_strided_slice %287 {offsets = [0, 32], sizes = [1, 32], strides = [1, 1]} : vector<1x128xf32> to vector<1x32xf32>
    %290 = vector.extract_strided_slice %287 {offsets = [0, 64], sizes = [1, 32], strides = [1, 1]} : vector<1x128xf32> to vector<1x32xf32>
    %291 = vector.extract_strided_slice %287 {offsets = [0, 96], sizes = [1, 32], strides = [1, 1]} : vector<1x128xf32> to vector<1x32xf32>
    %292 = arith.mulf %289, %254 : vector<1x32xf32>
    %293 = arith.mulf %288, %291 : vector<1x32xf32>
    %294 = arith.addf %292, %293 : vector<1x32xf32>
    %295 = math.tanh %294 : vector<1x32xf32>
    %296 = arith.mulf %290, %295 : vector<1x32xf32>
    %297 = vector.extract_strided_slice %12 {offsets = [7, 0], sizes = [1, 128], strides = [1, 1]} : vector<8x128xf32> to vector<1x128xf32>
    %298 = arith.truncf %276 : vector<1x32xf32> to vector<1x32xbf16>
    %cst_43 = arith.constant dense<0.000000e+00> : vector<1x128xf32>
    %299 = tpu.matmul %298, %4, %cst_43 {dimension_numbers = #tpu.dot_dimension_numbers<[1], [0], [0], [1], [0, 0, 1, 1], [], []>} : vector<1x32xbf16>, vector<32x128xbf16>, vector<1x128xf32> -> vector<1x128xf32>
    %300 = arith.addf %297, %299 : vector<1x128xf32>
    %301 = arith.negf %300 : vector<1x128xf32>
    %302 = math.exp %301 : vector<1x128xf32>
    %cst_44 = arith.constant 1.000000e+00 : f32
    %303 = vector.broadcast %cst_44 : f32 to vector<1x128xf32>
    %304 = arith.addf %303, %302 : vector<1x128xf32>
    %305 = arith.divf %303, %304 : vector<1x128xf32>
    %306 = math.tanh %300 : vector<1x128xf32>
    %307 = arith.select %2, %305, %306 : vector<1x128xi1>, vector<1x128xf32>
    %308 = vector.extract_strided_slice %307 {offsets = [0, 0], sizes = [1, 32], strides = [1, 1]} : vector<1x128xf32> to vector<1x32xf32>
    %309 = vector.extract_strided_slice %307 {offsets = [0, 32], sizes = [1, 32], strides = [1, 1]} : vector<1x128xf32> to vector<1x32xf32>
    %310 = vector.extract_strided_slice %307 {offsets = [0, 64], sizes = [1, 32], strides = [1, 1]} : vector<1x128xf32> to vector<1x32xf32>
    %311 = vector.extract_strided_slice %307 {offsets = [0, 96], sizes = [1, 32], strides = [1, 1]} : vector<1x128xf32> to vector<1x32xf32>
    %312 = arith.mulf %309, %274 : vector<1x32xf32>
    %313 = arith.mulf %308, %311 : vector<1x32xf32>
    %314 = arith.addf %312, %313 : vector<1x32xf32>
    %315 = math.tanh %314 : vector<1x32xf32>
    %316 = arith.mulf %310, %315 : vector<1x32xf32>
    %317 = tpu.concatenate %316, %296 in 1 : vector<1x32xf32>, vector<1x32xf32> -> vector<1x64xf32>
    %318 = arith.truncf %317 : vector<1x64xf32> to vector<1x64xbf16>
    %cst_45 = arith.constant dense<0.000000e+00> : vector<1x128xf32>
    %319 = tpu.matmul %318, %5, %cst_45 {dimension_numbers = #tpu.dot_dimension_numbers<[1], [0], [0], [1], [0, 0, 1, 1], [], []>} : vector<1x64xbf16>, vector<64x128xbf16>, vector<1x128xf32> -> vector<1x128xf32>
    %320 = arith.addf %319, %6 : vector<1x128xf32>
    %321 = arith.negf %320 : vector<1x128xf32>
    %322 = math.exp %321 : vector<1x128xf32>
    %cst_46 = arith.constant 1.000000e+00 : f32
    %323 = vector.broadcast %cst_46 : f32 to vector<1x128xf32>
    %324 = arith.addf %323, %322 : vector<1x128xf32>
    %325 = arith.divf %323, %324 : vector<1x128xf32>
    %326 = math.tanh %320 : vector<1x128xf32>
    %327 = arith.select %2, %325, %326 : vector<1x128xi1>, vector<1x128xf32>
    %328 = vector.extract_strided_slice %327 {offsets = [0, 0], sizes = [1, 32], strides = [1, 1]} : vector<1x128xf32> to vector<1x32xf32>
    %329 = vector.extract_strided_slice %327 {offsets = [0, 32], sizes = [1, 32], strides = [1, 1]} : vector<1x128xf32> to vector<1x32xf32>
    %330 = vector.extract_strided_slice %327 {offsets = [0, 64], sizes = [1, 32], strides = [1, 1]} : vector<1x128xf32> to vector<1x32xf32>
    %331 = vector.extract_strided_slice %327 {offsets = [0, 96], sizes = [1, 32], strides = [1, 1]} : vector<1x128xf32> to vector<1x32xf32>
    %332 = arith.mulf %329, %294 : vector<1x32xf32>
    %333 = arith.mulf %328, %331 : vector<1x32xf32>
    %334 = arith.addf %332, %333 : vector<1x32xf32>
    %335 = math.tanh %334 : vector<1x32xf32>
    %336 = arith.mulf %330, %335 : vector<1x32xf32>
    %c0_47 = arith.constant 0 : index
    %c0_48 = arith.constant 0 : index
    %337 = vector.load %arg7[%c0_47, %c0_48] : memref<32x8xf32, #tpu.memory_space<vmem>>, vector<32x8xf32>
    %cst_49 = arith.constant dense<0.000000e+00> : vector<1x8xf32>
    %338 = tpu.matmul %336, %337, %cst_49 {dimension_numbers = #tpu.dot_dimension_numbers<[1], [0], [0], [1], [0, 0, 1, 1], [], []>} : vector<1x32xf32>, vector<32x8xf32>, vector<1x8xf32> -> vector<1x8xf32>
    %c0_50 = arith.constant 0 : index
    %c0_51 = arith.constant 0 : index
    %339 = vector.load %arg8[%c0_50, %c0_51] : memref<1x8xf32, #tpu.memory_space<vmem>>, vector<1x8xf32>
    %340 = arith.addf %338, %339 : vector<1x8xf32>
    %cst_52 = arith.constant 0.000000e+00 : f32
    %341 = vector.broadcast %cst_52 : f32 to vector<1x8xf32>
    %342 = arith.maximumf %340, %341 : vector<1x8xf32>
    %cst_53 = arith.constant dense<0xFF800000> : vector<1xf32>
    %343 = vector.multi_reduction <maximumf>, %342, %cst_53 [1] : vector<1x8xf32> to vector<1xf32>
    %344 = vector.shape_cast %343 : vector<1xf32> to vector<1x1xf32>
    %345 = vector.broadcast %344 : vector<1x1xf32> to vector<1x8xf32>
    %346 = arith.subf %342, %345 : vector<1x8xf32>
    %347 = math.exp %346 : vector<1x8xf32>
    %cst_54 = arith.constant dense<0.000000e+00> : vector<1xf32>
    %348 = vector.multi_reduction <add>, %347, %cst_54 [1] : vector<1x8xf32> to vector<1xf32>
    %349 = vector.shape_cast %348 : vector<1xf32> to vector<1x1xf32>
    %350 = math.log %349 : vector<1x1xf32>
    %351 = arith.addf %344, %350 : vector<1x1xf32>
    %352 = vector.broadcast %351 : vector<1x1xf32> to vector<1x8xf32>
    %353 = arith.subf %342, %352 : vector<1x8xf32>
    %c0_55 = arith.constant 0 : index
    %c0_56 = arith.constant 0 : index
    %354 = vector.load %arg9[%c0_55, %c0_56] : memref<1x8xf32, #tpu.memory_space<vmem>>, vector<1x8xf32>
    tpu.vector_store %arg9[%c0_55, %c0_56], %353 {strides = array<i32>} : memref<1x8xf32, #tpu.memory_space<vmem>>, vector<1x8xf32>,
    return
  }
  func.func @transform_0(%arg0: i32) -> (i32, i32) {
    %c0_i32 = arith.constant 0 : i32
    %c0_i32_0 = arith.constant 0 : i32
    %c0_i32_1 = arith.constant 0 : i32
    return %c0_i32, %c0_i32_0 : i32, i32
  }
  func.func @transform_1(%arg0: i32) -> (i32, i32) {
    %c0_i32 = arith.constant 0 : i32
    %c0_i32_0 = arith.constant 0 : i32
    %c0_i32_1 = arith.constant 0 : i32
    return %c0_i32, %c0_i32_0 : i32, i32
  }
  func.func @transform_2(%arg0: i32) -> (i32, i32) {
    %c0_i32 = arith.constant 0 : i32
    %c0_i32_0 = arith.constant 0 : i32
    %c0_i32_1 = arith.constant 0 : i32
    return %c0_i32, %c0_i32_0 : i32, i32
  }
  func.func @transform_3(%arg0: i32) -> (i32, i32) {
    %c0_i32 = arith.constant 0 : i32
    %c0_i32_0 = arith.constant 0 : i32
    %c0_i32_1 = arith.constant 0 : i32
    return %c0_i32, %c0_i32_0 : i32, i32
  }
  func.func @transform_4(%arg0: i32) -> (i32, i32) {
    %c0_i32 = arith.constant 0 : i32
    %c0_i32_0 = arith.constant 0 : i32
    %c0_i32_1 = arith.constant 0 : i32
    return %c0_i32, %c0_i32_0 : i32, i32
  }
  func.func @transform_5(%arg0: i32) -> (i32, i32) {
    %c0_i32 = arith.constant 0 : i32
    %c0_i32_0 = arith.constant 0 : i32
    %c0_i32_1 = arith.constant 0 : i32
    return %c0_i32, %c0_i32_0 : i32, i32
  }
  func.func @transform_6(%arg0: i32) -> (i32, i32) {
    %c0_i32 = arith.constant 0 : i32
    %c0_i32_0 = arith.constant 0 : i32
    %c0_i32_1 = arith.constant 0 : i32
    return %c0_i32, %c0_i32_0 : i32, i32
  }
  func.func @transform_7(%arg0: i32) -> (i32, i32) {
    %c0_i32 = arith.constant 0 : i32
    %c0_i32_0 = arith.constant 0 : i32
    %c0_i32_1 = arith.constant 0 : i32
    return %c0_i32, %c0_i32_0 : i32, i32
  }
  func.func @transform_8(%arg0: i32) -> (i32, i32) {
    %c0_i32 = arith.constant 0 : i32
    %c0_i32_0 = arith.constant 0 : i32
    %c0_i32_1 = arith.constant 0 : i32
    return %c0_i32, %c0_i32_0 : i32, i32
  }
}

</mosaic_0001>

<llo_original>
// kernel: tpu_custom_call.1
$region0: #{tpu_custom_call.1}
  #allocation0 [shape = 'u32[]', space=smem, size = 0x4, offset = 0x4, fixed_abs, tag = 'smem constant byte address 0x4 - core index']
  #allocation1 [shape = 'u32[144,128]{1,0:T(1,128)}', space=vmem, size = 0x12000, scoped, tag = 'internal scratch']
  %s0 = inlined_call_operand.hbm [shape: f32[8,32], index: 0, kind: input, shape index: {}]
  %s1 = inlined_call_operand.vmem [shape: bf16[32,128], index: 1, kind: input, shape index: {}]
  %s2 = inlined_call_operand.hbm [shape: bf16[32,128], index: 2, kind: input, shape index: {}]
  %s3 = inlined_call_operand.vmem [shape: f32[1,128], index: 3, kind: input, shape index: {}]
  %s4 = inlined_call_operand.vmem [shape: bf16[64,128], index: 4, kind: input, shape index: {}]
  %s5 = inlined_call_operand.vmem [shape: f32[1,128], index: 5, kind: input, shape index: {}]
  %s6 = inlined_call_operand.vmem [shape: f32[32,8], index: 6, kind: input, shape index: {}]
  %s7 = inlined_call_operand.vmem [shape: f32[1,8], index: 7, kind: input, shape index: {}]
  %s8 = inlined_call_operand.hbm [shape: f32[1,8], index: 8, kind: output, shape index: {}]
  %s9 = sld [smem:[#allocation0]]
  $region50: #{tpu_custom_call.1} parent=0
    _
  %s11 = ssub.s32 1, %s9
  %s12 = scalar_select 0, %s11, %s9
  $region1: #{tpu_custom_call.1} parent=0
    #allocation2 [shape = 'u8[4096]{0}', space=vmem, size = 0x1000, scoped, tag = 'input window, operand 0, single buffered']
    #allocation3 [shape = 's32[1]{0}', space=sflag, size = 0x4, scoped, tag = 'scoped memory for tpu_custom_call.1']
    #allocation4 [shape = 's32[1]{0}', space=sflag, size = 0x4, scoped, tag = 'scoped memory for tpu_custom_call.1']
    #allocation5 [shape = 'u8[8192]{0}', space=vmem, size = 0x2000, scoped, tag = 'input window, operand 2, single buffered']
    #allocation6 [shape = 's32[1]{0}', space=sflag, size = 0x4, scoped, tag = 'scoped memory for tpu_custom_call.1']
    #allocation7 [shape = 'u8[512]{0}', space=vmem, size = 0x400, scoped, tag = 'output window, operand 0, single buffered']
    %13 = vsyncpa [#allocation3], 0
    %14 = vsyncpa [#allocation6], 0
    %15 = vsyncpa [#allocation4], 0
    // Predicated region
    $region2: #{tpu_custom_call.1} parent=1 // pred_check
      _
    $region3: #{tpu_custom_call.1} parent=1 // pred_check_branch
      %17 = sbr.rel (0) target = $region5
    $region4: #{tpu_custom_call.1} parent=1 // pred_region
      %s19 = ssub.s32 128, 128
      %20 = vsyncadd [#allocation3], %s19
      %s22 = sshll.u32 [#allocation2], 4
      %s23 = int_to_ptr.vmem [resolvable:$true] %s22
      %25 = dma.hbm_to_vmem [thread:$0]  %s0, 128, %s23, [#allocation3]
    $region5: #{tpu_custom_call.1} parent=1 // pred_fallthru
      _
    // Predicated region
    $region6: #{tpu_custom_call.1} parent=1 // pred_check
      _
    $region7: #{tpu_custom_call.1} parent=1 // pred_check_branch
      %27 = sbr.rel (0) target = $region9
    $region8: #{tpu_custom_call.1} parent=1 // pred_region
      _
    $region9: #{tpu_custom_call.1} parent=1 // pred_fallthru
      _
    // Predicated region
    $region10: #{tpu_custom_call.1} parent=1 // pred_check
      _
    $region11: #{tpu_custom_call.1} parent=1 // pred_check_branch
      %29 = sbr.rel (0) target = $region13
    $region12: #{tpu_custom_call.1} parent=1 // pred_region
      %s31 = ssub.s32 256, 256
      %32 = vsyncadd [#allocation6], %s31
      %s33 = sshll.u32 [#allocation5], 4
      %s34 = int_to_ptr.vmem [resolvable:$true] %s33
      %39 = dma.hbm_to_vmem [thread:$0]  %s2, 256, %s34, [#allocation6], 64, 64, 4
    $region13: #{tpu_custom_call.1} parent=1 // pred_fallthru
      _
    // Predicated region
    $region14: #{tpu_custom_call.1} parent=1 // pred_check
      _
    $region15: #{tpu_custom_call.1} parent=1 // pred_check_branch
      %41 = sbr.rel (0) target = $region17
    $region16: #{tpu_custom_call.1} parent=1 // pred_region
      _
    $region17: #{tpu_custom_call.1} parent=1 // pred_fallthru
      _
    // Predicated region
    $region18: #{tpu_custom_call.1} parent=1 // pred_check
      _
    $region19: #{tpu_custom_call.1} parent=1 // pred_check_branch
      %43 = sbr.rel (0) target = $region21
    $region20: #{tpu_custom_call.1} parent=1 // pred_region
      _
    $region21: #{tpu_custom_call.1} parent=1 // pred_fallthru
      _
    // Predicated region
    $region22: #{tpu_custom_call.1} parent=1 // pred_check
      _
    $region23: #{tpu_custom_call.1} parent=1 // pred_check_branch
      %45 = sbr.rel (0) target = $region25
    $region24: #{tpu_custom_call.1} parent=1 // pred_region
      _
    $region25: #{tpu_custom_call.1} parent=1 // pred_fallthru
      _
    // Predicated region
    $region26: #{tpu_custom_call.1} parent=1 // pred_check
      _
    $region27: #{tpu_custom_call.1} parent=1 // pred_check_branch
      %47 = sbr.rel (0) target = $region29
    $region28: #{tpu_custom_call.1} parent=1 // pred_region
      _
    $region29: #{tpu_custom_call.1} parent=1 // pred_fallthru
      _
    // Predicated region
    $region30: #{tpu_custom_call.1} parent=1 // pred_check
      _
    $region31: #{tpu_custom_call.1} parent=1 // pred_check_branch
      %49 = sbr.rel (0) target = $region33
    $region32: #{tpu_custom_call.1} parent=1 // pred_region
      _
    $region33: #{tpu_custom_call.1} parent=1 // pred_fallthru
      _
    // Predicated region
    $region34: #{tpu_custom_call.1} parent=1 // pred_check
      _
    $region35: #{tpu_custom_call.1} parent=1 // pred_check_branch
      %51 = sbr.rel (0) target = $region37
    $region36: #{tpu_custom_call.1} parent=1 // pred_region
      %52 = dma.done [#allocation3], 128
    $region37: #{tpu_custom_call.1} parent=1 // pred_fallthru
      _
    // Predicated region
    $region38: #{tpu_custom_call.1} parent=1 // pred_check
      _
    $region39: #{tpu_custom_call.1} parent=1 // pred_check_branch
      %54 = sbr.rel (0) target = $region41
    $region40: #{tpu_custom_call.1} parent=1 // pred_region
      %55 = dma.done [#allocation6], 256
    $region41: #{tpu_custom_call.1} parent=1 // pred_fallthru
      _
    %v57 = vlaneseq
    %v58 = vand.u32 %v57, 127
    %vm59 = vcmp.lt.s32.totalorder %v58, 96
    %v60 = vld [vmem:[%s1] sm:$0xf]
    %v61 = vld [vmem:[%s1 + $0x4] sm:$0xf]
    %v62 = vld [vmem:[%s1 + $0x8] sm:$0xf]
    %v63 = vld [vmem:[%s1 + $0xc] sm:$0xf]
    %v64 = vld [vmem:[#allocation5] sm:$0xf]
    %v65 = vld [vmem:[#allocation5 + $0x4] sm:$0xf]
    %v66 = vld [vmem:[#allocation5 + $0x8] sm:$0xf]
    %v67 = vld [vmem:[#allocation5 + $0xc] sm:$0xf]
    %v68 = vld [vmem:[%s4] sm:$0xf]
    %v69 = vld [vmem:[%s4 + $0x4] sm:$0xf]
    %v70 = vld [vmem:[%s4 + $0x8] sm:$0xf]
    %v71 = vld [vmem:[%s4 + $0xc] sm:$0xf]
    %v72 = vld [vmem:[%s4 + $0x10] sm:$0xf]
    %v73 = vld [vmem:[%s4 + $0x14] sm:$0xf]
    %v74 = vld [vmem:[%s4 + $0x18] sm:$0xf]
    %v75 = vld [vmem:[%s4 + $0x1c] sm:$0xf]
    %v76 = vld [vmem:[%s5] sm:$0x1]
    %v77 = vld [vmem:[#allocation2] sm:$0xff]
    %v78 = vpack.c.bf16 %v77, %v77
    %v79 = vld [vmem:[%s3] sm:$0x1]
    %v81 = vlaneseq
    %v82 = vshrl.u32 %v81, 7
    %v83 = vsub.s32 0, %v82
    %v84 = vrot.slane %v79, %v83
    %v90 = vunpack.c.l.b16 %v60
    %v91 = vunpack.c.l.b16 %v61
    %v92 = vunpack.c.l.b16 %v62
    %v93 = vunpack.c.l.b16 %v63
    %v94 = vpack.c.b16 %v91, %v90
    %v95 = vpack.c.b16 %v93, %v92
    %vm98 = vcmask 261120
    %v100 = vsel %vm98, %v78, 0
    %102 = vmatprep.subr.bf16.mxu0 0
    %103 = vmatpush1.bf16.msra.mxu0 %v94
    %104 = vmatprep.subr.bf16.mxu0 0
    %105 = vmatpush1.bf16.msra.mxu0 %v95
    %106 = vmatprep.subr.bf16.mxu0 0
    %107 = vmatpush1.bf16.msra.mxu0 0
    %108 = vmatprep.subr.bf16.mxu0 0
    %109 = vmatpush1.bf16.msra.mxu0 0
    %110 = vmatprep.subr.bf16.mxu0 0
    %111 = vmatpush1.bf16.msra.mxu0 0
    %112 = vmatprep.subr.bf16.mxu0 0
    %113 = vmatpush1.bf16.msra.mxu0 0
    %114 = vmatprep.subr.bf16.mxu0 0
    %115 = vmatpush1.bf16.msra.mxu0 0
    %116 = vmatprep.subr.bf16.mxu0 0
    %117 = vmatpush1.bf16.msra.mxu0 0
    %118 = vmatprep.subr.bf16.mxu0 0
    %119 = vmatpush1.bf16.msra.mxu0 0
    %120 = vmatprep.subr.bf16.mxu0 0
    %121 = vmatpush1.bf16.msra.mxu0 0
    %122 = vmatprep.subr.bf16.mxu0 0
    %123 = vmatpush1.bf16.msra.mxu0 0
    %124 = vmatprep.subr.bf16.mxu0 0
    %125 = vmatpush1.bf16.msra.mxu0 0
    %126 = vmatprep.subr.bf16.mxu0 0
    %127 = vmatpush1.bf16.msra.mxu0 0
    %128 = vmatprep.subr.bf16.mxu0 0
    %129 = vmatpush1.bf16.msra.mxu0 0
    %130 = vmatprep.subr.bf16.mxu0 0
    %131 = vmatpush1.bf16.msra.mxu0 0
    %132 = vmatprep.subr.bf16.mxu0 0
    %133 = vmatpush1.bf16.msra.mxu0 0
    %134 = vmatprep.mubr.bf16.mxu0 0
    %135 = vmatmul.mubr.bf16.gmra.mrb[0].mxu0 %v100
    %v136 = vpop.f32.mrb[0].mxu0
    %v137 = vadd.f32 %v84, %v136
    %v138 = vpop.f32.mrb[0].mxu0
    %v139 = vpop.f32.mrb[0].mxu0
    %v140 = vpop.f32.mrb[0].mxu0
    %141 = vdwg.mxu0
    %v146 = vunpack.c.l.b16 %v64
    %v147 = vunpack.c.l.b16 %v65
    %v148 = vunpack.c.l.b16 %v66
    %v149 = vunpack.c.l.b16 %v67
    %v150 = vpack.c.b16 %v147, %v146
    %v151 = vpack.c.b16 %v149, %v148
    %v155 = vsel %vm98, 0, 0
    %157 = vmatprep.subr.bf16.mxu0 0
    %158 = vmatpush1.bf16.msra.mxu0 %v150
    %159 = vmatprep.subr.bf16.mxu0 0
    %160 = vmatpush1.bf16.msra.mxu0 %v151
    %161 = vmatprep.subr.bf16.mxu0 0
    %162 = vmatpush1.bf16.msra.mxu0 0
    %163 = vmatprep.subr.bf16.mxu0 0
    %164 = vmatpush1.bf16.msra.mxu0 0
    %165 = vmatprep.subr.bf16.mxu0 0
    %166 = vmatpush1.bf16.msra.mxu0 0
    %167 = vmatprep.subr.bf16.mxu0 0
    %168 = vmatpush1.bf16.msra.mxu0 0
    %169 = vmatprep.subr.bf16.mxu0 0
    %170 = vmatpush1.bf16.msra.mxu0 0
    %171 = vmatprep.subr.bf16.mxu0 0
    %172 = vmatpush1.bf16.msra.mxu0 0
    %173 = vmatprep.subr.bf16.mxu0 0
    %174 = vmatpush1.bf16.msra.mxu0 0
    %175 = vmatprep.subr.bf16.mxu0 0
    %176 = vmatpush1.bf16.msra.mxu0 0
    %177 = vmatprep.subr.bf16.mxu0 0
    %178 = vmatpush1.bf16.msra.mxu0 0
    %179 = vmatprep.subr.bf16.mxu0 0
    %180 = vmatpush1.bf16.msra.mxu0 0
    %181 = vmatprep.subr.bf16.mxu0 0
    %182 = vmatpush1.bf16.msra.mxu0 0
    %183 = vmatprep.subr.bf16.mxu0 0
    %184 = vmatpush1.bf16.msra.mxu0 0
    %185 = vmatprep.subr.bf16.mxu0 0
    %186 = vmatpush1.bf16.msra.mxu0 0
    %187 = vmatprep.subr.bf16.mxu0 0
    %188 = vmatpush1.bf16.msra.mxu0 0
    %189 = vmatprep.mubr.bf16.mxu0 0
    %190 = vmatmul.mubr.bf16.gmra.mrb[0].mxu0 %v155
    %v191 = vpop.f32.mrb[0].mxu0
    %v192 = vadd.f32 0.0, %v191
    %v193 = vpop.f32.mrb[0].mxu0
    %v194 = vpop.f32.mrb[0].mxu0
    %v195 = vpop.f32.mrb[0].mxu0
    %196 = vdwg.mxu0
    %v197 = vadd.f32 %v137, %v192
    %v198 = vxor.u32 %v197, 2147483648
    %v199 = vmul.f32 %v198, 1.442695
    %v200 = vpow.pop %v199
    %v201 = vadd.f32 %v200, 1.0
    %v202 = vrcp.pop %v201
    %v203 = vmul.f32 1.0, %v202
    %v204 = vtanh.pop %v197
    %v205 = vsel %vm59, %v203, %v204
    %v206 = vmul.f32 %v205, 0.0
    %208 = vrot.lane.b32.xlu0 %v205, 32
    %v209 = vpop.permute.xlu0 %208
    %v211 = vmul.f32 %v205, %v209
    %213 = vrot.lane.b32.xlu0 %v211, 32
    %v214 = vpop.permute.xlu0 %213
    %v216 = vadd.f32 %v206, %v214
    %v217 = vtanh.pop %v216
    %219 = vrot.lane.b32.xlu0 %v217, 32
    %v220 = vpop.permute.xlu0 %219
    %v222 = vmul.f32 %v205, %v220
    %224 = vrot.lane.b32.xlu0 %v222, 64
    %v225 = vpop.permute.xlu0 %224
    %v227 = vsel %vm98, %v225, 0.0
    %v228 = vpack.c.bf16 %v227, %v227
    %v237 = vunpack.c.l.b16 %v68
    %v238 = vunpack.c.l.b16 %v69
    %v239 = vunpack.c.l.b16 %v70
    %v240 = vunpack.c.l.b16 %v71
    %v241 = vunpack.c.l.b16 %v72
    %v242 = vunpack.c.l.b16 %v73
    %v243 = vunpack.c.l.b16 %v74
    %v244 = vunpack.c.l.b16 %v75
    %v245 = vpack.c.b16 %v238, %v237
    %v246 = vpack.c.b16 %v240, %v239
    %v247 = vpack.c.b16 %v242, %v241
    %v248 = vpack.c.b16 %v244, %v243
    %vm253 = vcmask 523264
    %v255 = vsel %vm253, %v228, 0
    %257 = vmatprep.subr.bf16.mxu0 0
    %258 = vmatpush1.bf16.msra.mxu0 %v245
    %259 = vmatprep.subr.bf16.mxu0 0
    %260 = vmatpush1.bf16.msra.mxu0 %v246
    %261 = vmatprep.subr.bf16.mxu0 0
    %262 = vmatpush1.bf16.msra.mxu0 %v247
    %263 = vmatprep.subr.bf16.mxu0 0
    %264 = vmatpush1.bf16.msra.mxu0 %v248
    %265 = vmatprep.subr.bf16.mxu0 0
    %266 = vmatpush1.bf16.msra.mxu0 0
    %267 = vmatprep.subr.bf16.mxu0 0
    %268 = vmatpush1.bf16.msra.mxu0 0
    %269 = vmatprep.subr.bf16.mxu0 0
    %270 = vmatpush1.bf16.msra.mxu0 0
    %271 = vmatprep.subr.bf16.mxu0 0
    %272 = vmatpush1.bf16.msra.mxu0 0
    %273 = vmatprep.subr.bf16.mxu0 0
    %274 = vmatpush1.bf16.msra.mxu0 0
    %275 = vmatprep.subr.bf16.mxu0 0
    %276 = vmatpush1.bf16.msra.mxu0 0
    %277 = vmatprep.subr.bf16.mxu0 0
    %278 = vmatpush1.bf16.msra.mxu0 0
    %279 = vmatprep.subr.bf16.mxu0 0
    %280 = vmatpush1.bf16.msra.mxu0 0
    %281 = vmatprep.subr.bf16.mxu0 0
    %282 = vmatpush1.bf16.msra.mxu0 0
    %283 = vmatprep.subr.bf16.mxu0 0
    %284 = vmatpush1.bf16.msra.mxu0 0
    %285 = vmatprep.subr.bf16.mxu0 0
    %286 = vmatpush1.bf16.msra.mxu0 0
    %287 = vmatprep.subr.bf16.mxu0 0
    %288 = vmatpush1.bf16.msra.mxu0 0
    %289 = vmatprep.mubr.bf16.mxu0 0
    %290 = vmatmul.mubr.bf16.gmra.mrb[0].mxu0 %v255
    %v291 = vpop.f32.mrb[0].mxu0
    %v292 = vadd.f32 %v76, %v291
    %v293 = vpop.f32.mrb[0].mxu0
    %v294 = vpop.f32.mrb[0].mxu0
    %v295 = vpop.f32.mrb[0].mxu0
    %296 = vdwg.mxu0
    %v297 = vxor.u32 %v292, 2147483648
    %v298 = vmul.f32 %v297, 1.442695
    %v299 = vpow.pop %v298
    %v300 = vadd.f32 %v299, 1.0
    %v301 = vrcp.pop %v300
    %v302 = vmul.f32 1.0, %v301
    %v303 = vtanh.pop %v292
    %v304 = vsel %vm59, %v302, %v303
    %v305 = vmul.f32 %v304, 0.0
    %307 = vrot.lane.b32.xlu0 %v304, 32
    %v308 = vpop.permute.xlu0 %307
    %v310 = vmul.f32 %v304, %v308
    %312 = vrot.lane.b32.xlu0 %v310, 32
    %v313 = vpop.permute.xlu0 %312
    %v315 = vadd.f32 %v305, %v313
    %v316 = vtanh.pop %v315
    %318 = vrot.lane.b32.xlu0 %v316, 32
    %v319 = vpop.permute.xlu0 %318
    %v321 = vmul.f32 %v304, %v319
    %v322 = vpack.c.bf16 %v222, %v222
    %324 = vrot.lane.b32.xlu0 %v322, 64
    %v325 = vpop.permute.xlu0 %324
    %v327 = vsel %vm98, %v325, 0
    %329 = vmatprep.subr.bf16.mxu0 0
    %330 = vmatpush1.bf16.msra.mxu0 %v150
    %331 = vmatprep.subr.bf16.mxu0 0
    %332 = vmatpush1.bf16.msra.mxu0 %v151
    %333 = vmatprep.subr.bf16.mxu0 0
    %334 = vmatpush1.bf16.msra.mxu0 0
    %335 = vmatprep.subr.bf16.mxu0 0
    %336 = vmatpush1.bf16.msra.mxu0 0
    %337 = vmatprep.subr.bf16.mxu0 0
    %338 = vmatpush1.bf16.msra.mxu0 0
    %339 = vmatprep.subr.bf16.mxu0 0
    %340 = vmatpush1.bf16.msra.mxu0 0
    %341 = vmatprep.subr.bf16.mxu0 0
    %342 = vmatpush1.bf16.msra.mxu0 0
    %343 = vmatprep.subr.bf16.mxu0 0
    %344 = vmatpush1.bf16.msra.mxu0 0
    %345 = vmatprep.subr.bf16.mxu0 0
    %346 = vmatpush1.bf16.msra.mxu0 0
    %347 = vmatprep.subr.bf16.mxu0 0
    %348 = vmatpush1.bf16.msra.mxu0 0
    %349 = vmatprep.subr.bf16.mxu0 0
    %350 = vmatpush1.bf16.msra.mxu0 0
    %351 = vmatprep.subr.bf16.mxu0 0
    %352 = vmatpush1.bf16.msra.mxu0 0
    %353 = vmatprep.subr.bf16.mxu0 0
    %354 = vmatpush1.bf16.msra.mxu0 0
    %355 = vmatprep.subr.bf16.mxu0 0
    %356 = vmatpush1.bf16.msra.mxu0 0
    %357 = vmatprep.subr.bf16.mxu0 0
    %358 = vmatpush1.bf16.msra.mxu0 0
    %359 = vmatprep.subr.bf16.mxu0 0
    %360 = vmatpush1.bf16.msra.mxu0 0
    %361 = vmatprep.mubr.bf16.mxu0 0
    %362 = vmatmul.mubr.bf16.gmra.mrb[0].mxu0 %v327
    %v363 = vpop.f32.mrb[0].mxu0
    %v364 = vadd.f32 0.0, %v363
    %v365 = vpop.f32.mrb[0].mxu0
    %v366 = vpop.f32.mrb[0].mxu0
    %v367 = vpop.f32.mrb[0].mxu0
    %368 = vdwg.mxu0
    %v370 = vrot.slane %v364, 7
    %v372 = vadd.f32 %v137, %v370
    %v373 = vxor.u32 %v372, 2147483648
    %v374 = vmul.f32 %v373, 1.442695
    %v375 = vpow.pop %v374
    %v376 = vadd.f32 %v375, 1.0
    %v377 = vrcp.pop %v376
    %v378 = vmul.f32 1.0, %v377
    %v379 = vtanh.pop %v372
    %v380 = vsel %vm59, %v378, %v379
    %v382 = vrot.slane %v216, 7
    %v384 = vmul.f32 %v380, %v382
    %386 = vrot.lane.b32.xlu0 %v380, 32
    %v387 = vpop.permute.xlu0 %386
    %v389 = vmul.f32 %v380, %v387
    %391 = vrot.lane.b32.xlu0 %v389, 32
    %v392 = vpop.permute.xlu0 %391
    %v394 = vadd.f32 %v384, %v392
    %v395 = vtanh.pop %v394
    %397 = vrot.lane.b32.xlu0 %v395, 32
    %v398 = vpop.permute.xlu0 %397
    %v400 = vmul.f32 %v380, %v398
    %402 = vrot.lane.b32.xlu0 %v400, 64
    %v403 = vpop.permute.xlu0 %402
    %v406 = vrot.slane %v321, 7
    %407 = vrot.lane.b32.xlu0 %v406, 96
    %v408 = vpop.permute.xlu0 %407
    %v410 = vsel %vm98, %v403, %v408
    %v411 = vpack.c.bf16 %v410, %v410
    %v413 = vshrl.u32 %v411, 16
    %v416 = vsel %vm253, %v413, 0
    %418 = vmatprep.subr.bf16.mxu0 0
    %419 = vmatpush1.bf16.msra.mxu0 %v245
    %420 = vmatprep.subr.bf16.mxu0 0
    %421 = vmatpush1.bf16.msra.mxu0 %v246
    %422 = vmatprep.subr.bf16.mxu0 0
    %423 = vmatpush1.bf16.msra.mxu0 %v247
    %424 = vmatprep.subr.bf16.mxu0 0
    %425 = vmatpush1.bf16.msra.mxu0 %v248
    %426 = vmatprep.subr.bf16.mxu0 0
    %427 = vmatpush1.bf16.msra.mxu0 0
    %428 = vmatprep.subr.bf16.mxu0 0
    %429 = vmatpush1.bf16.msra.mxu0 0
    %430 = vmatprep.subr.bf16.mxu0 0
    %431 = vmatpush1.bf16.msra.mxu0 0
    %432 = vmatprep.subr.bf16.mxu0 0
    %433 = vmatpush1.bf16.msra.mxu0 0
    %434 = vmatprep.subr.bf16.mxu0 0
    %435 = vmatpush1.bf16.msra.mxu0 0
    %436 = vmatprep.subr.bf16.mxu0 0
    %437 = vmatpush1.bf16.msra.mxu0 0
    %438 = vmatprep.subr.bf16.mxu0 0
    %439 = vmatpush1.bf16.msra.mxu0 0
    %440 = vmatprep.subr.bf16.mxu0 0
    %441 = vmatpush1.bf16.msra.mxu0 0
    %442 = vmatprep.subr.bf16.mxu0 0
    %443 = vmatpush1.bf16.msra.mxu0 0
    %444 = vmatprep.subr.bf16.mxu0 0
    %445 = vmatpush1.bf16.msra.mxu0 0
    %446 = vmatprep.subr.bf16.mxu0 0
    %447 = vmatpush1.bf16.msra.mxu0 0
    %448 = vmatprep.subr.bf16.mxu0 0
    %449 = vmatpush1.bf16.msra.mxu0 0
    %450 = vmatprep.mubr.bf16.mxu0 0
    %451 = vmatmul.mubr.bf16.gmra.mrb[0].mxu0 %v416
    %v452 = vpop.f32.mrb[0].mxu0
    %v453 = vadd.f32 %v76, %v452
    %v454 = vpop.f32.mrb[0].mxu0
    %v455 = vpop.f32.mrb[0].mxu0
    %v456 = vpop.f32.mrb[0].mxu0
    %457 = vdwg.mxu0
    %v458 = vxor.u32 %v453, 2147483648
    %v459 = vmul.f32 %v458, 1.442695
    %v460 = vpow.pop %v459
    %v461 = vadd.f32 %v460, 1.0
    %v462 = vrcp.pop %v461
    %v463 = vmul.f32 1.0, %v462
    %v464 = vtanh.pop %v453
    %v465 = vsel %vm59, %v463, %v464
    %v466 = vmul.f32 %v465, %v315
    %468 = vrot.lane.b32.xlu0 %v465, 32
    %v469 = vpop.permute.xlu0 %468
    %v471 = vmul.f32 %v465, %v469
    %473 = vrot.lane.b32.xlu0 %v471, 32
    %v474 = vpop.permute.xlu0 %473
    %v476 = vadd.f32 %v466, %v474
    %v477 = vtanh.pop %v476
    %479 = vrot.lane.b32.xlu0 %v477, 32
    %v480 = vpop.permute.xlu0 %479
    %v482 = vmul.f32 %v465, %v480
    %v483 = vpack.c.bf16 %v400, %v400
    %v485 = vshrl.u32 %v483, 16
    %487 = vrot.lane.b32.xlu0 %v485, 64
    %v488 = vpop.permute.xlu0 %487
    %v490 = vsel %vm98, %v488, 0
    %492 = vmatprep.subr.bf16.mxu0 0
    %493 = vmatpush1.bf16.msra.mxu0 %v150
    %494 = vmatprep.subr.bf16.mxu0 0
    %495 = vmatpush1.bf16.msra.mxu0 %v151
    %496 = vmatprep.subr.bf16.mxu0 0
    %497 = vmatpush1.bf16.msra.mxu0 0
    %498 = vmatprep.subr.bf16.mxu0 0
    %499 = vmatpush1.bf16.msra.mxu0 0
    %500 = vmatprep.subr.bf16.mxu0 0
    %501 = vmatpush1.bf16.msra.mxu0 0
    %502 = vmatprep.subr.bf16.mxu0 0
    %503 = vmatpush1.bf16.msra.mxu0 0
    %504 = vmatprep.subr.bf16.mxu0 0
    %505 = vmatpush1.bf16.msra.mxu0 0
    %506 = vmatprep.subr.bf16.mxu0 0
    %507 = vmatpush1.bf16.msra.mxu0 0
    %508 = vmatprep.subr.bf16.mxu0 0
    %509 = vmatpush1.bf16.msra.mxu0 0
    %510 = vmatprep.subr.bf16.mxu0 0
    %511 = vmatpush1.bf16.msra.mxu0 0
    %512 = vmatprep.subr.bf16.mxu0 0
    %513 = vmatpush1.bf16.msra.mxu0 0
    %514 = vmatprep.subr.bf16.mxu0 0
    %515 = vmatpush1.bf16.msra.mxu0 0
    %516 = vmatprep.subr.bf16.mxu0 0
    %517 = vmatpush1.bf16.msra.mxu0 0
    %518 = vmatprep.subr.bf16.mxu0 0
    %519 = vmatpush1.bf16.msra.mxu0 0
    %520 = vmatprep.subr.bf16.mxu0 0
    %521 = vmatpush1.bf16.msra.mxu0 0
    %522 = vmatprep.subr.bf16.mxu0 0
    %523 = vmatpush1.bf16.msra.mxu0 0
    %524 = vmatprep.mubr.bf16.mxu0 0
    %525 = vmatmul.mubr.bf16.gmra.mrb[0].mxu0 %v490
    %v526 = vpop.f32.mrb[0].mxu0
    %v527 = vadd.f32 0.0, %v526
    %v528 = vpop.f32.mrb[0].mxu0
    %v529 = vpop.f32.mrb[0].mxu0
    %v530 = vpop.f32.mrb[0].mxu0
    %531 = vdwg.mxu0
    %v533 = vrot.slane %v527, 6
    %v535 = vadd.f32 %v137, %v533
    %v536 = vxor.u32 %v535, 2147483648
    %v537 = vmul.f32 %v536, 1.442695
    %v538 = vpow.pop %v537
    %v539 = vadd.f32 %v538, 1.0
    %v540 = vrcp.pop %v539
    %v541 = vmul.f32 1.0, %v540
    %v542 = vtanh.pop %v535
    %v543 = vsel %vm59, %v541, %v542
    %v545 = vrot.slane %v394, 7
    %v547 = vmul.f32 %v543, %v545
    %549 = vrot.lane.b32.xlu0 %v543, 32
    %v550 = vpop.permute.xlu0 %549
    %v552 = vmul.f32 %v543, %v550
    %554 = vrot.lane.b32.xlu0 %v552, 32
    %v555 = vpop.permute.xlu0 %554
    %v557 = vadd.f32 %v547, %v555
    %v558 = vtanh.pop %v557
    %560 = vrot.lane.b32.xlu0 %v558, 32
    %v561 = vpop.permute.xlu0 %560
    %v563 = vmul.f32 %v543, %v561
    %565 = vrot.lane.b32.xlu0 %v563, 64
    %v566 = vpop.permute.xlu0 %565
    %v569 = vrot.slane %v482, 6
    %570 = vrot.lane.b32.xlu0 %v569, 96
    %v571 = vpop.permute.xlu0 %570
    %v573 = vsel %vm98, %v566, %v571
    %v574 = vpack.c.bf16 %v573, %v573
    %v576 = vrot.slane %v574, 1
    %v578 = vsel %vm253, %v576, 0
    %580 = vmatprep.subr.bf16.mxu0 0
    %581 = vmatpush1.bf16.msra.mxu0 %v245
    %582 = vmatprep.subr.bf16.mxu0 0
    %583 = vmatpush1.bf16.msra.mxu0 %v246
    %584 = vmatprep.subr.bf16.mxu0 0
    %585 = vmatpush1.bf16.msra.mxu0 %v247
    %586 = vmatprep.subr.bf16.mxu0 0
    %587 = vmatpush1.bf16.msra.mxu0 %v248
    %588 = vmatprep.subr.bf16.mxu0 0
    %589 = vmatpush1.bf16.msra.mxu0 0
    %590 = vmatprep.subr.bf16.mxu0 0
    %591 = vmatpush1.bf16.msra.mxu0 0
    %592 = vmatprep.subr.bf16.mxu0 0
    %593 = vmatpush1.bf16.msra.mxu0 0
    %594 = vmatprep.subr.bf16.mxu0 0
    %595 = vmatpush1.bf16.msra.mxu0 0
    %596 = vmatprep.subr.bf16.mxu0 0
    %597 = vmatpush1.bf16.msra.mxu0 0
    %598 = vmatprep.subr.bf16.mxu0 0
    %599 = vmatpush1.bf16.msra.mxu0 0
    %600 = vmatprep.subr.bf16.mxu0 0
    %601 = vmatpush1.bf16.msra.mxu0 0
    %602 = vmatprep.subr.bf16.mxu0 0
    %603 = vmatpush1.bf16.msra.mxu0 0
    %604 = vmatprep.subr.bf16.mxu0 0
    %605 = vmatpush1.bf16.msra.mxu0 0
    %606 = vmatprep.subr.bf16.mxu0 0
    %607 = vmatpush1.bf16.msra.mxu0 0
    %608 = vmatprep.subr.bf16.mxu0 0
    %609 = vmatpush1.bf16.msra.mxu0 0
    %610 = vmatprep.subr.bf16.mxu0 0
    %611 = vmatpush1.bf16.msra.mxu0 0
    %612 = vmatprep.mubr.bf16.mxu0 0
    %613 = vmatmul.mubr.bf16.gmra.mrb[0].mxu0 %v578
    %v614 = vpop.f32.mrb[0].mxu0
    %v615 = vadd.f32 %v76, %v614
    %v616 = vpop.f32.mrb[0].mxu0
    %v617 = vpop.f32.mrb[0].mxu0
    %v618 = vpop.f32.mrb[0].mxu0
    %619 = vdwg.mxu0
    %v620 = vxor.u32 %v615, 2147483648
    %v621 = vmul.f32 %v620, 1.442695
    %v622 = vpow.pop %v621
    %v623 = vadd.f32 %v622, 1.0
    %v624 = vrcp.pop %v623
    %v625 = vmul.f32 1.0, %v624
    %v626 = vtanh.pop %v615
    %v627 = vsel %vm59, %v625, %v626
    %v628 = vmul.f32 %v627, %v476
    %630 = vrot.lane.b32.xlu0 %v627, 32
    %v631 = vpop.permute.xlu0 %630
    %v633 = vmul.f32 %v627, %v631
    %635 = vrot.lane.b32.xlu0 %v633, 32
    %v636 = vpop.permute.xlu0 %635
    %v638 = vadd.f32 %v628, %v636
    %v639 = vtanh.pop %v638
    %641 = vrot.lane.b32.xlu0 %v639, 32
    %v642 = vpop.permute.xlu0 %641
    %v644 = vmul.f32 %v627, %v642
    %v645 = vpack.c.bf16 %v563, %v563
    %v647 = vrot.slane %v645, 1
    %648 = vrot.lane.b32.xlu0 %v647, 64
    %v649 = vpop.permute.xlu0 %648
    %v651 = vsel %vm98, %v649, 0
    %653 = vmatprep.subr.bf16.mxu0 0
    %654 = vmatpush1.bf16.msra.mxu0 %v150
    %655 = vmatprep.subr.bf16.mxu0 0
    %656 = vmatpush1.bf16.msra.mxu0 %v151
    %657 = vmatprep.subr.bf16.mxu0 0
    %658 = vmatpush1.bf16.msra.mxu0 0
    %659 = vmatprep.subr.bf16.mxu0 0
    %660 = vmatpush1.bf16.msra.mxu0 0
    %661 = vmatprep.subr.bf16.mxu0 0
    %662 = vmatpush1.bf16.msra.mxu0 0
    %663 = vmatprep.subr.bf16.mxu0 0
    %664 = vmatpush1.bf16.msra.mxu0 0
    %665 = vmatprep.subr.bf16.mxu0 0
    %666 = vmatpush1.bf16.msra.mxu0 0
    %667 = vmatprep.subr.bf16.mxu0 0
    %668 = vmatpush1.bf16.msra.mxu0 0
    %669 = vmatprep.subr.bf16.mxu0 0
    %670 = vmatpush1.bf16.msra.mxu0 0
    %671 = vmatprep.subr.bf16.mxu0 0
    %672 = vmatpush1.bf16.msra.mxu0 0
    %673 = vmatprep.subr.bf16.mxu0 0
    %674 = vmatpush1.bf16.msra.mxu0 0
    %675 = vmatprep.subr.bf16.mxu0 0
    %676 = vmatpush1.bf16.msra.mxu0 0
    %677 = vmatprep.subr.bf16.mxu0 0
    %678 = vmatpush1.bf16.msra.mxu0 0
    %679 = vmatprep.subr.bf16.mxu0 0
    %680 = vmatpush1.bf16.msra.mxu0 0
    %681 = vmatprep.subr.bf16.mxu0 0
    %682 = vmatpush1.bf16.msra.mxu0 0
    %683 = vmatprep.subr.bf16.mxu0 0
    %684 = vmatpush1.bf16.msra.mxu0 0
    %685 = vmatprep.mubr.bf16.mxu0 0
    %686 = vmatmul.mubr.bf16.gmra.mrb[0].mxu0 %v651
    %v687 = vpop.f32.mrb[0].mxu0
    %v688 = vadd.f32 0.0, %v687
    %v689 = vpop.f32.mrb[0].mxu0
    %v690 = vpop.f32.mrb[0].mxu0
    %v691 = vpop.f32.mrb[0].mxu0
    %692 = vdwg.mxu0
    %v694 = vrot.slane %v688, 5
    %v696 = vadd.f32 %v137, %v694
    %v697 = vxor.u32 %v696, 2147483648
    %v698 = vmul.f32 %v697, 1.442695
    %v699 = vpow.pop %v698
    %v700 = vadd.f32 %v699, 1.0
    %v701 = vrcp.pop %v700
    %v702 = vmul.f32 1.0, %v701
    %v703 = vtanh.pop %v696
    %v704 = vsel %vm59, %v702, %v703
    %v706 = vrot.slane %v557, 7
    %v708 = vmul.f32 %v704, %v706
    %710 = vrot.lane.b32.xlu0 %v704, 32
    %v711 = vpop.permute.xlu0 %710
    %v713 = vmul.f32 %v704, %v711
    %715 = vrot.lane.b32.xlu0 %v713, 32
    %v716 = vpop.permute.xlu0 %715
    %v718 = vadd.f32 %v708, %v716
    %v719 = vtanh.pop %v718
    %721 = vrot.lane.b32.xlu0 %v719, 32
    %v722 = vpop.permute.xlu0 %721
    %v724 = vmul.f32 %v704, %v722
    %726 = vrot.lane.b32.xlu0 %v724, 64
    %v727 = vpop.permute.xlu0 %726
    %v730 = vrot.slane %v644, 5
    %731 = vrot.lane.b32.xlu0 %v730, 96
    %v732 = vpop.permute.xlu0 %731
    %v734 = vsel %vm98, %v727, %v732
    %v735 = vpack.c.bf16 %v734, %v734
    %v737 = vshrl.u32 %v735, 16
    %v739 = vrot.slane %v737, 1
    %v741 = vsel %vm253, %v739, 0
    %743 = vmatprep.subr.bf16.mxu0 0
    %744 = vmatpush1.bf16.msra.mxu0 %v245
    %745 = vmatprep.subr.bf16.mxu0 0
    %746 = vmatpush1.bf16.msra.mxu0 %v246
    %747 = vmatprep.subr.bf16.mxu0 0
    %748 = vmatpush1.bf16.msra.mxu0 %v247
    %749 = vmatprep.subr.bf16.mxu0 0
    %750 = vmatpush1.bf16.msra.mxu0 %v248
    %751 = vmatprep.subr.bf16.mxu0 0
    %752 = vmatpush1.bf16.msra.mxu0 0
    %753 = vmatprep.subr.bf16.mxu0 0
    %754 = vmatpush1.bf16.msra.mxu0 0
    %755 = vmatprep.subr.bf16.mxu0 0
    %756 = vmatpush1.bf16.msra.mxu0 0
    %757 = vmatprep.subr.bf16.mxu0 0
    %758 = vmatpush1.bf16.msra.mxu0 0
    %759 = vmatprep.subr.bf16.mxu0 0
    %760 = vmatpush1.bf16.msra.mxu0 0
    %761 = vmatprep.subr.bf16.mxu0 0
    %762 = vmatpush1.bf16.msra.mxu0 0
    %763 = vmatprep.subr.bf16.mxu0 0
    %764 = vmatpush1.bf16.msra.mxu0 0
    %765 = vmatprep.subr.bf16.mxu0 0
    %766 = vmatpush1.bf16.msra.mxu0 0
    %767 = vmatprep.subr.bf16.mxu0 0
    %768 = vmatpush1.bf16.msra.mxu0 0
    %769 = vmatprep.subr.bf16.mxu0 0
    %770 = vmatpush1.bf16.msra.mxu0 0
    %771 = vmatprep.subr.bf16.mxu0 0
    %772 = vmatpush1.bf16.msra.mxu0 0
    %773 = vmatprep.subr.bf16.mxu0 0
    %774 = vmatpush1.bf16.msra.mxu0 0
    %775 = vmatprep.mubr.bf16.mxu0 0
    %776 = vmatmul.mubr.bf16.gmra.mrb[0].mxu0 %v741
    %v777 = vpop.f32.mrb[0].mxu0
    %v778 = vadd.f32 %v76, %v777
    %v779 = vpop.f32.mrb[0].mxu0
    %v780 = vpop.f32.mrb[0].mxu0
    %v781 = vpop.f32.mrb[0].mxu0
    %782 = vdwg.mxu0
    %v783 = vxor.u32 %v778, 2147483648
    %v784 = vmul.f32 %v783, 1.442695
    %v785 = vpow.pop %v784
    %v786 = vadd.f32 %v785, 1.0
    %v787 = vrcp.pop %v786
    %v788 = vmul.f32 1.0, %v787
    %v789 = vtanh.pop %v778
    %v790 = vsel %vm59, %v788, %v789
    %v791 = vmul.f32 %v790, %v638
    %793 = vrot.lane.b32.xlu0 %v790, 32
    %v794 = vpop.permute.xlu0 %793
    %v796 = vmul.f32 %v790, %v794
    %798 = vrot.lane.b32.xlu0 %v796, 32
    %v799 = vpop.permute.xlu0 %798
    %v801 = vadd.f32 %v791, %v799
    %v802 = vtanh.pop %v801
    %804 = vrot.lane.b32.xlu0 %v802, 32
    %v805 = vpop.permute.xlu0 %804
    %v807 = vmul.f32 %v790, %v805
    %v808 = vpack.c.bf16 %v724, %v724
    %v810 = vshrl.u32 %v808, 16
    %v812 = vrot.slane %v810, 1
    %813 = vrot.lane.b32.xlu0 %v812, 64
    %v814 = vpop.permute.xlu0 %813
    %v816 = vsel %vm98, %v814, 0
    %818 = vmatprep.subr.bf16.mxu0 0
    %819 = vmatpush1.bf16.msra.mxu0 %v150
    %820 = vmatprep.subr.bf16.mxu0 0
    %821 = vmatpush1.bf16.msra.mxu0 %v151
    %822 = vmatprep.subr.bf16.mxu0 0
    %823 = vmatpush1.bf16.msra.mxu0 0
    %824 = vmatprep.subr.bf16.mxu0 0
    %825 = vmatpush1.bf16.msra.mxu0 0
    %826 = vmatprep.subr.bf16.mxu0 0
    %827 = vmatpush1.bf16.msra.mxu0 0
    %828 = vmatprep.subr.bf16.mxu0 0
    %829 = vmatpush1.bf16.msra.mxu0 0
    %830 = vmatprep.subr.bf16.mxu0 0
    %831 = vmatpush1.bf16.msra.mxu0 0
    %832 = vmatprep.subr.bf16.mxu0 0
    %833 = vmatpush1.bf16.msra.mxu0 0
    %834 = vmatprep.subr.bf16.mxu0 0
    %835 = vmatpush1.bf16.msra.mxu0 0
    %836 = vmatprep.subr.bf16.mxu0 0
    %837 = vmatpush1.bf16.msra.mxu0 0
    %838 = vmatprep.subr.bf16.mxu0 0
    %839 = vmatpush1.bf16.msra.mxu0 0
    %840 = vmatprep.subr.bf16.mxu0 0
    %841 = vmatpush1.bf16.msra.mxu0 0
    %842 = vmatprep.subr.bf16.mxu0 0
    %843 = vmatpush1.bf16.msra.mxu0 0
    %844 = vmatprep.subr.bf16.mxu0 0
    %845 = vmatpush1.bf16.msra.mxu0 0
    %846 = vmatprep.subr.bf16.mxu0 0
    %847 = vmatpush1.bf16.msra.mxu0 0
    %848 = vmatprep.subr.bf16.mxu0 0
    %849 = vmatpush1.bf16.msra.mxu0 0
    %850 = vmatprep.mubr.bf16.mxu0 0
    %851 = vmatmul.mubr.bf16.gmra.mrb[0].mxu0 %v816
    %v852 = vpop.f32.mrb[0].mxu0
    %v853 = vadd.f32 0.0, %v852
    %v854 = vpop.f32.mrb[0].mxu0
    %v855 = vpop.f32.mrb[0].mxu0
    %v856 = vpop.f32.mrb[0].mxu0
    %857 = vdwg.mxu0
    %v859 = vrot.slane %v853, 4
    %v861 = vadd.f32 %v137, %v859
    %v862 = vxor.u32 %v861, 2147483648
    %v863 = vmul.f32 %v862, 1.442695
    %v864 = vpow.pop %v863
    %v865 = vadd.f32 %v864, 1.0
    %v866 = vrcp.pop %v865
    %v867 = vmul.f32 1.0, %v866
    %v868 = vtanh.pop %v861
    %v869 = vsel %vm59, %v867, %v868
    %v871 = vrot.slane %v718, 7
    %v873 = vmul.f32 %v869, %v871
    %875 = vrot.lane.b32.xlu0 %v869, 32
    %v876 = vpop.permute.xlu0 %875
    %v878 = vmul.f32 %v869, %v876
    %880 = vrot.lane.b32.xlu0 %v878, 32
    %v881 = vpop.permute.xlu0 %880
    %v883 = vadd.f32 %v873, %v881
    %v884 = vtanh.pop %v883
    %886 = vrot.lane.b32.xlu0 %v884, 32
    %v887 = vpop.permute.xlu0 %886
    %v889 = vmul.f32 %v869, %v887
    %891 = vrot.lane.b32.xlu0 %v889, 64
    %v892 = vpop.permute.xlu0 %891
    %v895 = vrot.slane %v807, 4
    %896 = vrot.lane.b32.xlu0 %v895, 96
    %v897 = vpop.permute.xlu0 %896
    %v899 = vsel %vm98, %v892, %v897
    %v900 = vpack.c.bf16 %v899, %v899
    %v902 = vrot.slane %v900, 2
    %v904 = vsel %vm253, %v902, 0
    %906 = vmatprep.subr.bf16.mxu0 0
    %907 = vmatpush1.bf16.msra.mxu0 %v245
    %908 = vmatprep.subr.bf16.mxu0 0
    %909 = vmatpush1.bf16.msra.mxu0 %v246
    %910 = vmatprep.subr.bf16.mxu0 0
    %911 = vmatpush1.bf16.msra.mxu0 %v247
    %912 = vmatprep.subr.bf16.mxu0 0
    %913 = vmatpush1.bf16.msra.mxu0 %v248
    %914 = vmatprep.subr.bf16.mxu0 0
    %915 = vmatpush1.bf16.msra.mxu0 0
    %916 = vmatprep.subr.bf16.mxu0 0
    %917 = vmatpush1.bf16.msra.mxu0 0
    %918 = vmatprep.subr.bf16.mxu0 0
    %919 = vmatpush1.bf16.msra.mxu0 0
    %920 = vmatprep.subr.bf16.mxu0 0
    %921 = vmatpush1.bf16.msra.mxu0 0
    %922 = vmatprep.subr.bf16.mxu0 0
    %923 = vmatpush1.bf16.msra.mxu0 0
    %924 = vmatprep.subr.bf16.mxu0 0
    %925 = vmatpush1.bf16.msra.mxu0 0
    %926 = vmatprep.subr.bf16.mxu0 0
    %927 = vmatpush1.bf16.msra.mxu0 0
    %928 = vmatprep.subr.bf16.mxu0 0
    %929 = vmatpush1.bf16.msra.mxu0 0
    %930 = vmatprep.subr.bf16.mxu0 0
    %931 = vmatpush1.bf16.msra.mxu0 0
    %932 = vmatprep.subr.bf16.mxu0 0
    %933 = vmatpush1.bf16.msra.mxu0 0
    %934 = vmatprep.subr.bf16.mxu0 0
    %935 = vmatpush1.bf16.msra.mxu0 0
    %936 = vmatprep.subr.bf16.mxu0 0
    %937 = vmatpush1.bf16.msra.mxu0 0
    %938 = vmatprep.mubr.bf16.mxu0 0
    %939 = vmatmul.mubr.bf16.gmra.mrb[0].mxu0 %v904
    %v940 = vpop.f32.mrb[0].mxu0
    %v941 = vadd.f32 %v76, %v940
    %v942 = vpop.f32.mrb[0].mxu0
    %v943 = vpop.f32.mrb[0].mxu0
    %v944 = vpop.f32.mrb[0].mxu0
    %945 = vdwg.mxu0
    %v946 = vxor.u32 %v941, 2147483648
    %v947 = vmul.f32 %v946, 1.442695
    %v948 = vpow.pop %v947
    %v949 = vadd.f32 %v948, 1.0
    %v950 = vrcp.pop %v949
    %v951 = vmul.f32 1.0, %v950
    %v952 = vtanh.pop %v941
    %v953 = vsel %vm59, %v951, %v952
    %v954 = vmul.f32 %v953, %v801
    %956 = vrot.lane.b32.xlu0 %v953, 32
    %v957 = vpop.permute.xlu0 %956
    %v959 = vmul.f32 %v953, %v957
    %961 = vrot.lane.b32.xlu0 %v959, 32
    %v962 = vpop.permute.xlu0 %961
    %v964 = vadd.f32 %v954, %v962
    %v965 = vtanh.pop %v964
    %967 = vrot.lane.b32.xlu0 %v965, 32
    %v968 = vpop.permute.xlu0 %967
    %v970 = vmul.f32 %v953, %v968
    %v971 = vpack.c.bf16 %v889, %v889
    %v973 = vrot.slane %v971, 2
    %974 = vrot.lane.b32.xlu0 %v973, 64
    %v975 = vpop.permute.xlu0 %974
    %v977 = vsel %vm98, %v975, 0
    %979 = vmatprep.subr.bf16.mxu0 0
    %980 = vmatpush1.bf16.msra.mxu0 %v150
    %981 = vmatprep.subr.bf16.mxu0 0
    %982 = vmatpush1.bf16.msra.mxu0 %v151
    %983 = vmatprep.subr.bf16.mxu0 0
    %984 = vmatpush1.bf16.msra.mxu0 0
    %985 = vmatprep.subr.bf16.mxu0 0
    %986 = vmatpush1.bf16.msra.mxu0 0
    %987 = vmatprep.subr.bf16.mxu0 0
    %988 = vmatpush1.bf16.msra.mxu0 0
    %989 = vmatprep.subr.bf16.mxu0 0
    %990 = vmatpush1.bf16.msra.mxu0 0
    %991 = vmatprep.subr.bf16.mxu0 0
    %992 = vmatpush1.bf16.msra.mxu0 0
    %993 = vmatprep.subr.bf16.mxu0 0
    %994 = vmatpush1.bf16.msra.mxu0 0
    %995 = vmatprep.subr.bf16.mxu0 0
    %996 = vmatpush1.bf16.msra.mxu0 0
    %997 = vmatprep.subr.bf16.mxu0 0
    %998 = vmatpush1.bf16.msra.mxu0 0
    %999 = vmatprep.subr.bf16.mxu0 0
    %1000 = vmatpush1.bf16.msra.mxu0 0
    %1001 = vmatprep.subr.bf16.mxu0 0
    %1002 = vmatpush1.bf16.msra.mxu0 0
    %1003 = vmatprep.subr.bf16.mxu0 0
    %1004 = vmatpush1.bf16.msra.mxu0 0
    %1005 = vmatprep.subr.bf16.mxu0 0
    %1006 = vmatpush1.bf16.msra.mxu0 0
    %1007 = vmatprep.subr.bf16.mxu0 0
    %1008 = vmatpush1.bf16.msra.mxu0 0
    %1009 = vmatprep.subr.bf16.mxu0 0
    %1010 = vmatpush1.bf16.msra.mxu0 0
    %1011 = vmatprep.mubr.bf16.mxu0 0
    %1012 = vmatmul.mubr.bf16.gmra.mrb[0].mxu0 %v977
    %v1013 = vpop.f32.mrb[0].mxu0
    %v1014 = vadd.f32 0.0, %v1013
    %v1015 = vpop.f32.mrb[0].mxu0
    %v1016 = vpop.f32.mrb[0].mxu0
    %v1017 = vpop.f32.mrb[0].mxu0
    %1018 = vdwg.mxu0
    %v1020 = vrot.slane %v1014, 3
    %v1022 = vadd.f32 %v137, %v1020
    %v1023 = vxor.u32 %v1022, 2147483648
    %v1024 = vmul.f32 %v1023, 1.442695
    %v1025 = vpow.pop %v1024
    %v1026 = vadd.f32 %v1025, 1.0
    %v1027 = vrcp.pop %v1026
    %v1028 = vmul.f32 1.0, %v1027
    %v1029 = vtanh.pop %v1022
    %v1030 = vsel %vm59, %v1028, %v1029
    %v1032 = vrot.slane %v883, 7
    %v1034 = vmul.f32 %v1030, %v1032
    %1036 = vrot.lane.b32.xlu0 %v1030, 32
    %v1037 = vpop.permute.xlu0 %1036
    %v1039 = vmul.f32 %v1030, %v1037
    %1041 = vrot.lane.b32.xlu0 %v1039, 32
    %v1042 = vpop.permute.xlu0 %1041
    %v1044 = vadd.f32 %v1034, %v1042
    %v1045 = vtanh.pop %v1044
    %1047 = vrot.lane.b32.xlu0 %v1045, 32
    %v1048 = vpop.permute.xlu0 %1047
    %v1050 = vmul.f32 %v1030, %v1048
    %1052 = vrot.lane.b32.xlu0 %v1050, 64
    %v1053 = vpop.permute.xlu0 %1052
    %v1056 = vrot.slane %v970, 3
    %1057 = vrot.lane.b32.xlu0 %v1056, 96
    %v1058 = vpop.permute.xlu0 %1057
    %v1060 = vsel %vm98, %v1053, %v1058
    %v1061 = vpack.c.bf16 %v1060, %v1060
    %v1063 = vshrl.u32 %v1061, 16
    %v1065 = vrot.slane %v1063, 2
    %v1067 = vsel %vm253, %v1065, 0
    %1069 = vmatprep.subr.bf16.mxu0 0
    %1070 = vmatpush1.bf16.msra.mxu0 %v245
    %1071 = vmatprep.subr.bf16.mxu0 0
    %1072 = vmatpush1.bf16.msra.mxu0 %v246
    %1073 = vmatprep.subr.bf16.mxu0 0
    %1074 = vmatpush1.bf16.msra.mxu0 %v247
    %1075 = vmatprep.subr.bf16.mxu0 0
    %1076 = vmatpush1.bf16.msra.mxu0 %v248
    %1077 = vmatprep.subr.bf16.mxu0 0
    %1078 = vmatpush1.bf16.msra.mxu0 0
    %1079 = vmatprep.subr.bf16.mxu0 0
    %1080 = vmatpush1.bf16.msra.mxu0 0
    %1081 = vmatprep.subr.bf16.mxu0 0
    %1082 = vmatpush1.bf16.msra.mxu0 0
    %1083 = vmatprep.subr.bf16.mxu0 0
    %1084 = vmatpush1.bf16.msra.mxu0 0
    %1085 = vmatprep.subr.bf16.mxu0 0
    %1086 = vmatpush1.bf16.msra.mxu0 0
    %1087 = vmatprep.subr.bf16.mxu0 0
    %1088 = vmatpush1.bf16.msra.mxu0 0
    %1089 = vmatprep.subr.bf16.mxu0 0
    %1090 = vmatpush1.bf16.msra.mxu0 0
    %1091 = vmatprep.subr.bf16.mxu0 0
    %1092 = vmatpush1.bf16.msra.mxu0 0
    %1093 = vmatprep.subr.bf16.mxu0 0
    %1094 = vmatpush1.bf16.msra.mxu0 0
    %1095 = vmatprep.subr.bf16.mxu0 0
    %1096 = vmatpush1.bf16.msra.mxu0 0
    %1097 = vmatprep.subr.bf16.mxu0 0
    %1098 = vmatpush1.bf16.msra.mxu0 0
    %1099 = vmatprep.subr.bf16.mxu0 0
    %1100 = vmatpush1.bf16.msra.mxu0 0
    %1101 = vmatprep.mubr.bf16.mxu0 0
    %1102 = vmatmul.mubr.bf16.gmra.mrb[0].mxu0 %v1067
    %v1103 = vpop.f32.mrb[0].mxu0
    %v1104 = vadd.f32 %v76, %v1103
    %v1105 = vpop.f32.mrb[0].mxu0
    %v1106 = vpop.f32.mrb[0].mxu0
    %v1107 = vpop.f32.mrb[0].mxu0
    %1108 = vdwg.mxu0
    %v1109 = vxor.u32 %v1104, 2147483648
    %v1110 = vmul.f32 %v1109, 1.442695
    %v1111 = vpow.pop %v1110
    %v1112 = vadd.f32 %v1111, 1.0
    %v1113 = vrcp.pop %v1112
    %v1114 = vmul.f32 1.0, %v1113
    %v1115 = vtanh.pop %v1104
    %v1116 = vsel %vm59, %v1114, %v1115
    %v1117 = vmul.f32 %v1116, %v964
    %1119 = vrot.lane.b32.xlu0 %v1116, 32
    %v1120 = vpop.permute.xlu0 %1119
    %v1122 = vmul.f32 %v1116, %v1120
    %1124 = vrot.lane.b32.xlu0 %v1122, 32
    %v1125 = vpop.permute.xlu0 %1124
    %v1127 = vadd.f32 %v1117, %v1125
    %v1128 = vtanh.pop %v1127
    %1130 = vrot.lane.b32.xlu0 %v1128, 32
    %v1131 = vpop.permute.xlu0 %1130
    %v1133 = vmul.f32 %v1116, %v1131
    %v1134 = vpack.c.bf16 %v1050, %v1050
    %v1136 = vshrl.u32 %v1134, 16
    %v1138 = vrot.slane %v1136, 2
    %1139 = vrot.lane.b32.xlu0 %v1138, 64
    %v1140 = vpop.permute.xlu0 %1139
    %v1142 = vsel %vm98, %v1140, 0
    %1144 = vmatprep.subr.bf16.mxu0 0
    %1145 = vmatpush1.bf16.msra.mxu0 %v150
    %1146 = vmatprep.subr.bf16.mxu0 0
    %1147 = vmatpush1.bf16.msra.mxu0 %v151
    %1148 = vmatprep.subr.bf16.mxu0 0
    %1149 = vmatpush1.bf16.msra.mxu0 0
    %1150 = vmatprep.subr.bf16.mxu0 0
    %1151 = vmatpush1.bf16.msra.mxu0 0
    %1152 = vmatprep.subr.bf16.mxu0 0
    %1153 = vmatpush1.bf16.msra.mxu0 0
    %1154 = vmatprep.subr.bf16.mxu0 0
    %1155 = vmatpush1.bf16.msra.mxu0 0
    %1156 = vmatprep.subr.bf16.mxu0 0
    %1157 = vmatpush1.bf16.msra.mxu0 0
    %1158 = vmatprep.subr.bf16.mxu0 0
    %1159 = vmatpush1.bf16.msra.mxu0 0
    %1160 = vmatprep.subr.bf16.mxu0 0
    %1161 = vmatpush1.bf16.msra.mxu0 0
    %1162 = vmatprep.subr.bf16.mxu0 0
    %1163 = vmatpush1.bf16.msra.mxu0 0
    %1164 = vmatprep.subr.bf16.mxu0 0
    %1165 = vmatpush1.bf16.msra.mxu0 0
    %1166 = vmatprep.subr.bf16.mxu0 0
    %1167 = vmatpush1.bf16.msra.mxu0 0
    %1168 = vmatprep.subr.bf16.mxu0 0
    %1169 = vmatpush1.bf16.msra.mxu0 0
    %1170 = vmatprep.subr.bf16.mxu0 0
    %1171 = vmatpush1.bf16.msra.mxu0 0
    %1172 = vmatprep.subr.bf16.mxu0 0
    %1173 = vmatpush1.bf16.msra.mxu0 0
    %1174 = vmatprep.subr.bf16.mxu0 0
    %1175 = vmatpush1.bf16.msra.mxu0 0
    %1176 = vmatprep.mubr.bf16.mxu0 0
    %1177 = vmatmul.mubr.bf16.gmra.mrb[0].mxu0 %v1142
    %v1178 = vpop.f32.mrb[0].mxu0
    %v1179 = vadd.f32 0.0, %v1178
    %v1180 = vpop.f32.mrb[0].mxu0
    %v1181 = vpop.f32.mrb[0].mxu0
    %v1182 = vpop.f32.mrb[0].mxu0
    %1183 = vdwg.mxu0
    %v1185 = vrot.slane %v1179, 2
    %v1187 = vadd.f32 %v137, %v1185
    %v1188 = vxor.u32 %v1187, 2147483648
    %v1189 = vmul.f32 %v1188, 1.442695
    %v1190 = vpow.pop %v1189
    %v1191 = vadd.f32 %v1190, 1.0
    %v1192 = vrcp.pop %v1191
    %v1193 = vmul.f32 1.0, %v1192
    %v1194 = vtanh.pop %v1187
    %v1195 = vsel %vm59, %v1193, %v1194
    %v1197 = vrot.slane %v1044, 7
    %v1199 = vmul.f32 %v1195, %v1197
    %1201 = vrot.lane.b32.xlu0 %v1195, 32
    %v1202 = vpop.permute.xlu0 %1201
    %v1204 = vmul.f32 %v1195, %v1202
    %1206 = vrot.lane.b32.xlu0 %v1204, 32
    %v1207 = vpop.permute.xlu0 %1206
    %v1209 = vadd.f32 %v1199, %v1207
    %v1210 = vtanh.pop %v1209
    %1212 = vrot.lane.b32.xlu0 %v1210, 32
    %v1213 = vpop.permute.xlu0 %1212
    %v1215 = vmul.f32 %v1195, %v1213
    %1217 = vrot.lane.b32.xlu0 %v1215, 64
    %v1218 = vpop.permute.xlu0 %1217
    %v1221 = vrot.slane %v1133, 2
    %1222 = vrot.lane.b32.xlu0 %v1221, 96
    %v1223 = vpop.permute.xlu0 %1222
    %v1225 = vsel %vm98, %v1218, %v1223
    %v1226 = vpack.c.bf16 %v1225, %v1225
    %v1228 = vrot.slane %v1226, 3
    %v1230 = vsel %vm253, %v1228, 0
    %1232 = vmatprep.subr.bf16.mxu0 0
    %1233 = vmatpush1.bf16.msra.mxu0 %v245
    %1234 = vmatprep.subr.bf16.mxu0 0
    %1235 = vmatpush1.bf16.msra.mxu0 %v246
    %1236 = vmatprep.subr.bf16.mxu0 0
    %1237 = vmatpush1.bf16.msra.mxu0 %v247
    %1238 = vmatprep.subr.bf16.mxu0 0
    %1239 = vmatpush1.bf16.msra.mxu0 %v248
    %1240 = vmatprep.subr.bf16.mxu0 0
    %1241 = vmatpush1.bf16.msra.mxu0 0
    %1242 = vmatprep.subr.bf16.mxu0 0
    %1243 = vmatpush1.bf16.msra.mxu0 0
    %1244 = vmatprep.subr.bf16.mxu0 0
    %1245 = vmatpush1.bf16.msra.mxu0 0
    %1246 = vmatprep.subr.bf16.mxu0 0
    %1247 = vmatpush1.bf16.msra.mxu0 0
    %1248 = vmatprep.subr.bf16.mxu0 0
    %1249 = vmatpush1.bf16.msra.mxu0 0
    %1250 = vmatprep.subr.bf16.mxu0 0
    %1251 = vmatpush1.bf16.msra.mxu0 0
    %1252 = vmatprep.subr.bf16.mxu0 0
    %1253 = vmatpush1.bf16.msra.mxu0 0
    %1254 = vmatprep.subr.bf16.mxu0 0
    %1255 = vmatpush1.bf16.msra.mxu0 0
    %1256 = vmatprep.subr.bf16.mxu0 0
    %1257 = vmatpush1.bf16.msra.mxu0 0
    %1258 = vmatprep.subr.bf16.mxu0 0
    %1259 = vmatpush1.bf16.msra.mxu0 0
    %1260 = vmatprep.subr.bf16.mxu0 0
    %1261 = vmatpush1.bf16.msra.mxu0 0
    %1262 = vmatprep.subr.bf16.mxu0 0
    %1263 = vmatpush1.bf16.msra.mxu0 0
    %1264 = vmatprep.mubr.bf16.mxu0 0
    %1265 = vmatmul.mubr.bf16.gmra.mrb[0].mxu0 %v1230
    %v1266 = vpop.f32.mrb[0].mxu0
    %v1267 = vadd.f32 %v76, %v1266
    %v1268 = vpop.f32.mrb[0].mxu0
    %v1269 = vpop.f32.mrb[0].mxu0
    %v1270 = vpop.f32.mrb[0].mxu0
    %1271 = vdwg.mxu0
    %v1272 = vxor.u32 %v1267, 2147483648
    %v1273 = vmul.f32 %v1272, 1.442695
    %v1274 = vpow.pop %v1273
    %v1275 = vadd.f32 %v1274, 1.0
    %v1276 = vrcp.pop %v1275
    %v1277 = vmul.f32 1.0, %v1276
    %v1278 = vtanh.pop %v1267
    %v1279 = vsel %vm59, %v1277, %v1278
    %v1280 = vmul.f32 %v1279, %v1127
    %1282 = vrot.lane.b32.xlu0 %v1279, 32
    %v1283 = vpop.permute.xlu0 %1282
    %v1285 = vmul.f32 %v1279, %v1283
    %1287 = vrot.lane.b32.xlu0 %v1285, 32
    %v1288 = vpop.permute.xlu0 %1287
    %v1290 = vadd.f32 %v1280, %v1288
    %v1291 = vtanh.pop %v1290
    %1293 = vrot.lane.b32.xlu0 %v1291, 32
    %v1294 = vpop.permute.xlu0 %1293
    %v1296 = vmul.f32 %v1279, %v1294
    %v1297 = vpack.c.bf16 %v1215, %v1215
    %v1299 = vrot.slane %v1297, 3
    %1300 = vrot.lane.b32.xlu0 %v1299, 64
    %v1301 = vpop.permute.xlu0 %1300
    %v1303 = vsel %vm98, %v1301, 0
    %1305 = vmatprep.subr.bf16.mxu0 0
    %1306 = vmatpush1.bf16.msra.mxu0 %v150
    %1307 = vmatprep.subr.bf16.mxu0 0
    %1308 = vmatpush1.bf16.msra.mxu0 %v151
    %1309 = vmatprep.subr.bf16.mxu0 0
    %1310 = vmatpush1.bf16.msra.mxu0 0
    %1311 = vmatprep.subr.bf16.mxu0 0
    %1312 = vmatpush1.bf16.msra.mxu0 0
    %1313 = vmatprep.subr.bf16.mxu0 0
    %1314 = vmatpush1.bf16.msra.mxu0 0
    %1315 = vmatprep.subr.bf16.mxu0 0
    %1316 = vmatpush1.bf16.msra.mxu0 0
    %1317 = vmatprep.subr.bf16.mxu0 0
    %1318 = vmatpush1.bf16.msra.mxu0 0
    %1319 = vmatprep.subr.bf16.mxu0 0
    %1320 = vmatpush1.bf16.msra.mxu0 0
    %1321 = vmatprep.subr.bf16.mxu0 0
    %1322 = vmatpush1.bf16.msra.mxu0 0
    %1323 = vmatprep.subr.bf16.mxu0 0
    %1324 = vmatpush1.bf16.msra.mxu0 0
    %1325 = vmatprep.subr.bf16.mxu0 0
    %1326 = vmatpush1.bf16.msra.mxu0 0
    %1327 = vmatprep.subr.bf16.mxu0 0
    %1328 = vmatpush1.bf16.msra.mxu0 0
    %1329 = vmatprep.subr.bf16.mxu0 0
    %1330 = vmatpush1.bf16.msra.mxu0 0
    %1331 = vmatprep.subr.bf16.mxu0 0
    %1332 = vmatpush1.bf16.msra.mxu0 0
    %1333 = vmatprep.subr.bf16.mxu0 0
    %1334 = vmatpush1.bf16.msra.mxu0 0
    %1335 = vmatprep.subr.bf16.mxu0 0
    %1336 = vmatpush1.bf16.msra.mxu0 0
    %1337 = vmatprep.mubr.bf16.mxu0 0
    %1338 = vmatmul.mubr.bf16.gmra.mrb[0].mxu0 %v1303
    %v1339 = vpop.f32.mrb[0].mxu0
    %v1340 = vadd.f32 0.0, %v1339
    %v1341 = vpop.f32.mrb[0].mxu0
    %v1342 = vpop.f32.mrb[0].mxu0
    %v1343 = vpop.f32.mrb[0].mxu0
    %1344 = vdwg.mxu0
    %v1346 = vrot.slane %v1340, 1
    %v1348 = vadd.f32 %v137, %v1346
    %v1349 = vxor.u32 %v1348, 2147483648
    %v1350 = vmul.f32 %v1349, 1.442695
    %v1351 = vpow.pop %v1350
    %v1352 = vadd.f32 %v1351, 1.0
    %v1353 = vrcp.pop %v1352
    %v1354 = vmul.f32 1.0, %v1353
    %v1355 = vtanh.pop %v1348
    %v1356 = vsel %vm59, %v1354, %v1355
    %v1358 = vrot.slane %v1209, 7
    %v1360 = vmul.f32 %v1356, %v1358
    %1362 = vrot.lane.b32.xlu0 %v1356, 32
    %v1363 = vpop.permute.xlu0 %1362
    %v1365 = vmul.f32 %v1356, %v1363
    %1367 = vrot.lane.b32.xlu0 %v1365, 32
    %v1368 = vpop.permute.xlu0 %1367
    %v1370 = vadd.f32 %v1360, %v1368
    %v1371 = vtanh.pop %v1370
    %1373 = vrot.lane.b32.xlu0 %v1371, 32
    %v1374 = vpop.permute.xlu0 %1373
    %v1376 = vmul.f32 %v1356, %v1374
    %1378 = vrot.lane.b32.xlu0 %v1376, 64
    %v1379 = vpop.permute.xlu0 %1378
    %v1382 = vrot.slane %v1296, 1
    %1383 = vrot.lane.b32.xlu0 %v1382, 96
    %v1384 = vpop.permute.xlu0 %1383
    %v1386 = vsel %vm98, %v1379, %v1384
    %v1387 = vpack.c.bf16 %v1386, %v1386
    %v1389 = vshrl.u32 %v1387, 16
    %v1391 = vrot.slane %v1389, 3
    %v1393 = vsel %vm253, %v1391, 0
    %1395 = vmatprep.subr.bf16.mxu0 0
    %1396 = vmatpush1.bf16.msra.mxu0 %v245
    %1397 = vmatprep.subr.bf16.mxu0 0
    %1398 = vmatpush1.bf16.msra.mxu0 %v246
    %1399 = vmatprep.subr.bf16.mxu0 0
    %1400 = vmatpush1.bf16.msra.mxu0 %v247
    %1401 = vmatprep.subr.bf16.mxu0 0
    %1402 = vmatpush1.bf16.msra.mxu0 %v248
    %1403 = vmatprep.subr.bf16.mxu0 0
    %1404 = vmatpush1.bf16.msra.mxu0 0
    %1405 = vmatprep.subr.bf16.mxu0 0
    %1406 = vmatpush1.bf16.msra.mxu0 0
    %1407 = vmatprep.subr.bf16.mxu0 0
    %1408 = vmatpush1.bf16.msra.mxu0 0
    %1409 = vmatprep.subr.bf16.mxu0 0
    %1410 = vmatpush1.bf16.msra.mxu0 0
    %1411 = vmatprep.subr.bf16.mxu0 0
    %1412 = vmatpush1.bf16.msra.mxu0 0
    %1413 = vmatprep.subr.bf16.mxu0 0
    %1414 = vmatpush1.bf16.msra.mxu0 0
    %1415 = vmatprep.subr.bf16.mxu0 0
    %1416 = vmatpush1.bf16.msra.mxu0 0
    %1417 = vmatprep.subr.bf16.mxu0 0
    %1418 = vmatpush1.bf16.msra.mxu0 0
    %1419 = vmatprep.subr.bf16.mxu0 0
    %1420 = vmatpush1.bf16.msra.mxu0 0
    %1421 = vmatprep.subr.bf16.mxu0 0
    %1422 = vmatpush1.bf16.msra.mxu0 0
    %1423 = vmatprep.subr.bf16.mxu0 0
    %1424 = vmatpush1.bf16.msra.mxu0 0
    %1425 = vmatprep.subr.bf16.mxu0 0
    %1426 = vmatpush1.bf16.msra.mxu0 0
    %1427 = vmatprep.mubr.bf16.mxu0 0
    %1428 = vmatmul.mubr.bf16.gmra.mrb[0].mxu0 %v1393
    %v1429 = vpop.f32.mrb[0].mxu0
    %v1430 = vadd.f32 %v76, %v1429
    %v1431 = vpop.f32.mrb[0].mxu0
    %v1432 = vpop.f32.mrb[0].mxu0
    %v1433 = vpop.f32.mrb[0].mxu0
    %1434 = vdwg.mxu0
    %v1435 = vxor.u32 %v1430, 2147483648
    %v1436 = vmul.f32 %v1435, 1.442695
    %v1437 = vpow.pop %v1436
    %v1438 = vadd.f32 %v1437, 1.0
    %v1439 = vrcp.pop %v1438
    %v1440 = vmul.f32 1.0, %v1439
    %v1441 = vtanh.pop %v1430
    %v1442 = vsel %vm59, %v1440, %v1441
    %v1443 = vmul.f32 %v1442, %v1290
    %1445 = vrot.lane.b32.xlu0 %v1442, 32
    %v1446 = vpop.permute.xlu0 %1445
    %v1448 = vmul.f32 %v1442, %v1446
    %1450 = vrot.lane.b32.xlu0 %v1448, 32
    %v1451 = vpop.permute.xlu0 %1450
    %v1453 = vadd.f32 %v1443, %v1451
    %v1454 = vtanh.pop %v1453
    %1456 = vrot.lane.b32.xlu0 %v1454, 32
    %v1457 = vpop.permute.xlu0 %1456
    %v1459 = vmul.f32 %v1442, %v1457
    %v1460 = vld [vmem:[%s6] sm:$0xff]
    %v1461 = vld [vmem:[%s6 + $0x8] sm:$0xff]
    %v1462 = vld [vmem:[%s6 + $0x10] sm:$0xff]
    %v1463 = vld [vmem:[%s6 + $0x18] sm:$0xff]
    %v1464 = vld [vmem:[%s7] sm:$0x1]
    %1466 = vrot.lane.b32.xlu0 %v1459, 64
    %v1467 = vpop.permute.xlu0 %1466
    %v1468 = vsel %vm98, %v1467, 0
    %1470 = vmatprep.subr.mxu0 0.0
    %1471 = vmatpush1.msra.mxu0 %v1460
    %1472 = vmatprep.subr.mxu0 0.0
    %1473 = vmatpush1.msra.mxu0 %v1461
    %1474 = vmatprep.subr.mxu0 0.0
    %1475 = vmatpush1.msra.mxu0 %v1462
    %1476 = vmatprep.subr.mxu0 0.0
    %1477 = vmatpush1.msra.mxu0 %v1463
    %1478 = vmatprep.subr.mxu0 0.0
    %1479 = vmatpush1.msra.mxu0 0.0
    %1480 = vmatprep.subr.mxu0 0.0
    %1481 = vmatpush1.msra.mxu0 0.0
    %1482 = vmatprep.subr.mxu0 0.0
    %1483 = vmatpush1.msra.mxu0 0.0
    %1484 = vmatprep.subr.mxu0 0.0
    %1485 = vmatpush1.msra.mxu0 0.0
    %1486 = vmatprep.subr.mxu0 0.0
    %1487 = vmatpush1.msra.mxu0 0.0
    %1488 = vmatprep.subr.mxu0 0.0
    %1489 = vmatpush1.msra.mxu0 0.0
    %1490 = vmatprep.subr.mxu0 0.0
    %1491 = vmatpush1.msra.mxu0 0.0
    %1492 = vmatprep.subr.mxu0 0.0
    %1493 = vmatpush1.msra.mxu0 0.0
    %1494 = vmatprep.subr.mxu0 0.0
    %1495 = vmatpush1.msra.mxu0 0.0
    %1496 = vmatprep.subr.mxu0 0.0
    %1497 = vmatpush1.msra.mxu0 0.0
    %1498 = vmatprep.subr.mxu0 0.0
    %1499 = vmatpush1.msra.mxu0 0.0
    %1500 = vmatprep.subr.mxu0 0.0
    %1501 = vmatpush1.msra.mxu0 0.0
    %1502 = vmatprep.subr.mxu0 0.0
    %1503 = vmatpush1.msra.mxu0 0.0
    %1504 = vmatprep.subr.mxu0 0.0
    %1505 = vmatpush1.msra.mxu0 0.0
    %1506 = vmatprep.subr.mxu0 0.0
    %1507 = vmatpush1.msra.mxu0 0.0
    %1508 = vmatprep.subr.mxu0 0.0
    %1509 = vmatpush1.msra.mxu0 0.0
    %1510 = vmatprep.subr.mxu0 0.0
    %1511 = vmatpush1.msra.mxu0 0.0
    %1512 = vmatprep.subr.mxu0 0.0
    %1513 = vmatpush1.msra.mxu0 0.0
    %1514 = vmatprep.subr.mxu0 0.0
    %1515 = vmatpush1.msra.mxu0 0.0
    %1516 = vmatprep.subr.mxu0 0.0
    %1517 = vmatpush1.msra.mxu0 0.0
    %1518 = vmatprep.subr.mxu0 0.0
    %1519 = vmatpush1.msra.mxu0 0.0
    %1520 = vmatprep.subr.mxu0 0.0
    %1521 = vmatpush1.msra.mxu0 0.0
    %1522 = vmatprep.subr.mxu0 0.0
    %1523 = vmatpush1.msra.mxu0 0.0
    %1524 = vmatprep.subr.mxu0 0.0
    %1525 = vmatpush1.msra.mxu0 0.0
    %1526 = vmatprep.subr.mxu0 0.0
    %1527 = vmatpush1.msra.mxu0 0.0
    %1528 = vmatprep.subr.mxu0 0.0
    %1529 = vmatpush1.msra.mxu0 0.0
    %1530 = vmatprep.subr.mxu0 0.0
    %1531 = vmatpush1.msra.mxu0 0.0
    %1532 = vmatprep.subr.mxu0 0.0
    %1533 = vmatpush1.msra.mxu0 0.0
    %1534 = vmatprep.mubr.f32.mxu0 0.0
    %1535 = vmatmul.mubr.f32.gmra.mrb[0].mxu0 %v1468
    %v1536 = vpop.f32.mrb[0].mxu0
    %v1537 = vadd.f32 %v1464, %v1536
    %v1538 = vpop.f32.mrb[0].mxu0
    %1539 = vdwg.mxu0
    %v1540 = vmax.f32 %v1537, 0.0
    %vm1541 = vcmask 57344
    %v1542 = vsel %vm1541, %v1540, -inf
    %1543 = vmax.xlane.f32.xlu0 %v1542
    %v1544 = vpop.xlane.xlu0 %1543
    %v1545 = vsub.f32 %v1540, %v1544
    %v1546 = vmul.f32 %v1545, 1.442695
    %v1547 = vpow.pop %v1546
    %v1548 = vsel %vm1541, %v1547, 0.0
    %1549 = vadd.xlane.f32.xlu0 %v1548
    %v1550 = vpop.xlane.xlu0 %1549
    %v1551 = vlog2.pop %v1550
    %v1552 = vmul.f32 %v1551, 0.6931472
    %v1553 = vadd.f32 %v1544, %v1552
    %v1554 = vsub.f32 %v1540, %v1553
    %1555 = vst.msk [vmem:[#allocation7] sm:$0x1] %vm1541, %v1554
    // Predicated region
    $region42: #{tpu_custom_call.1} parent=1 // pred_check
      _
    $region43: #{tpu_custom_call.1} parent=1 // pred_check_branch
      %1557 = sbr.rel (0) target = $region45
    $region44: #{tpu_custom_call.1} parent=1 // pred_region
      %s1559 = ssub.s32 16, 16
      %1560 = vsyncadd [#allocation4], %s1559
      %s1562 = sshll.u32 [#allocation7], 4
      %s1563 = int_to_ptr.vmem [resolvable:$true] %s1562
      %1565 = dma.vmem_to_hbm [thread:$0]  %s1563, 16, %s8, [#allocation4]
    $region45: #{tpu_custom_call.1} parent=1 // pred_fallthru
      _
    // Predicated region
    $region46: #{tpu_custom_call.1} parent=1 // pred_check
      _
    $region47: #{tpu_custom_call.1} parent=1 // pred_check_branch
      %1567 = sbr.rel (0) target = $region49
    $region48: #{tpu_custom_call.1} parent=1 // pred_region
      %1568 = dma.done [#allocation4], 16
    $region49: #{tpu_custom_call.1} parent=1 // pred_fallthru
      _
    %1569 = vsyncpa [#allocation3], 1
    %1570 = vsyncpa [#allocation6], 1
    %1571 = vsyncpa [#allocation4], 1

</llo_original>
